<compile_context>
chip_gen: v7x
topology: tpu7x:2x2x1
jax: 0.10.0
libtpu: 0.0.40
codegen_flags: <defaults>
</compile_context>

<pallas_src>
import functools

import jax
import jax.numpy as jnp
import numpy as np
from jax import lax
from jax.experimental import pallas as pl
from jax.experimental.pallas import tpu as pltpu


def _round_up(x, m):
    return ((x + m - 1) // m) * m


def _fused_pconv_kernel(*refs, layer_dims, kpads, taps, MARG, NW, winsize,
                        activation):
    """One grid step = one packed group of batch elements, all layers fused.

    refs = (x_ref, w0, b0, w1, b1, ..., out_ref)
      x_ref:  (1, Kpad0+1, FW)   rows 0..Cin0-1 = x*mask, row Cin0 = mask,
                                 rows Cin0+1..Kpad0-1 = zeros,
                                 row Kpad0 = interior indicator.  FW = NW+2*MARG.
      wi:     (Couti+1, kh*kw*Kpadi)  fused 2-D augmented weight (last row set
                                      = ones-kernel -> mask window-sum).
      bi:     (Couti, 1) f32
      out_ref:(1, CoutL+1, NW)   rows 0..CoutL-1 = last-layer output (padded
                                 frame layout), row CoutL = update_mask.
    """
    n_layers = len(layer_dims)
    x_ref = refs[0]
    w_refs = [refs[1 + 2 * i] for i in range(n_layers)]
    b_refs = [refs[2 + 2 * i] for i in range(n_layers)]
    out_ref = refs[1 + 2 * n_layers]

    xa = x_ref[0]                                    # (Kpad0+1, FW)
    Kpad0 = kpads[0]
    frp = xa[0:Kpad0, :]                             # padded frame value
    interior = xa[Kpad0:Kpad0 + 1, MARG:MARG + NW]   # (1, NW), 1 @ real pixels

    # ---- statically-unrolled layer loop; intermediates never leave VMEM ----
    for li, (_cin, Cout) in enumerate(layer_dims):
        is_last = li == n_layers - 1

        # Stacked RHS, tap-major: (kh*kw*Kpad, NW).  Each tap block is a
        # lane-shifted window of the frame; blocks are 8-sublane aligned so the
        # concatenation is tile-aligned (no sublane relayout).
        rhs = jnp.concatenate(
            [frp[:, MARG + d:MARG + d + NW] for d in taps], axis=0)

        # ONE fused MXU matmul per layer (conv rows + mask window-sum row).
        acc = jnp.dot(w_refs[li][...], rhs,
                      preferred_element_type=jnp.float32)    # (Cout+1, NW)

        conv = acc[0:Cout, :]                        # (Cout, NW)
        msum = acc[Cout:Cout + 1, :]                 # (1, NW) raw mask win-sum
        um = jnp.clip(msum, 0.0, 1.0)                # update_mask
        # approx=True would move this to the EUP but exceeds the 1e-4 budget.
        ratio = winsize * pl.reciprocal(msum + 1e-6, approx=False) * um
        b = b_refs[li][...].astype(jnp.float32)      # (Cout, 1)
        y = (conv * ratio + b) * um                  # bias path of the ref

        if not is_last:
            if activation == "relu":
                y = jnp.maximum(y, 0.0)
            elif activation == "leaky_relu":
                y = jnp.where(y >= 0.0, y, 0.2 * y)
            elif activation == "gelu":
                # TODO(synk): tanh approximation; PyTorch F.gelu default is erf.
                y = jax.nn.gelu(y, approximate=True)
            um_i = um * interior                     # zero pad ring / gaps
            Kpad_n = kpads[li + 1]
            pieces = [(y * um_i).astype(frp.dtype), um_i.astype(frp.dtype)]
            if Kpad_n > Cout + 1:
                pieces.append(jnp.zeros((Kpad_n - Cout - 1, NW), frp.dtype))
            data = jnp.concatenate(pieces, axis=0)   # (Kpad_n, NW)
            zmarg = jnp.zeros((Kpad_n, MARG), frp.dtype)
            frp = jnp.concatenate([zmarg, data, zmarg], axis=1)  # next frame
        else:
            # Single lane-dense store: conv rows + update_mask row (NW % 128 == 0).
            out_ref[0] = jnp.concatenate([y, um], axis=0).astype(out_ref.dtype)


def multilayer_pconv(x, mask, params, paddings, activation="relu"):
    """OptimizedMultilayerPConv.forward (stride=1, groups=1, multi_channel=False).

    x:        (B, Cin, H, W)  NCHW (PyTorch layout)
    mask:     (B, 1, H, W) or None
    params:   list of (weight (Cout, Cin, kh, kw) OIHW, bias (Cout,))
    paddings: list of int (or (ph, pw)) per layer
    returns   (out (B, CoutL, H, W), update_mask (B, 1, H, W))
    """
    B, Cin0, H, W = x.shape
    n = len(params)
    kh, kw = params[0][0].shape[2], params[0][0].shape[3]
    pads = [p if isinstance(p, tuple) else (p, p) for p in paddings]
    ph, pw = pads[0]

    assert all(w.shape[2] == kh and w.shape[3] == kw for w, _ in params)
    assert all(p == (ph, pw) for p in pads)
    assert kh == kw and ph == pw and 2 * ph == kh - 1, (
        "fused kernel supports square, spatial-preserving layers "
        "(stride=1, 2*padding == kernel_size-1)")
    assert params[0][0].shape[1] == Cin0
    for i in range(1, n):
        assert params[i][0].shape[1] == params[i - 1][0].shape[0]
    # TODO(synk): general stride/dilation/groups/multi_channel masks and
    # non-spatial-preserving padding are not implemented.
    pad = ph

    if mask is None:
        mask = jnp.ones((B, 1, H, W), x.dtype)
    if mask.shape[1] != 1:                  # multi_channel=False -> first ch.
        mask = mask[:, 0:1]
    mask = mask.astype(x.dtype)

    Hp, Wp = H + 2 * pad, W + 2 * pad
    LP = Hp * Wp
    bleed = pad * (Wp + 1)                  # max |lane shift| of any tap
    SEG = _round_up(LP + bleed, 128)        # per-batch lane segment (gap>=bleed)
    MARG = _round_up(max(bleed, 1), 128)    # zero margin for shifted slices

    # Batch packing: keep >= 2 grid steps when B >= 2 (one per v7x TensorCore),
    # pack the remaining batch elements along the lane/N axis of the matmuls.
    G = min(B, 2)
    Bp = -(-B // G)
    Bpad = G * Bp
    NW = Bp * SEG
    FW = NW + 2 * MARG

    layer_dims = tuple((w.shape[1], w.shape[0]) for w, _ in params)
    kpads = tuple(_round_up(cin + 1, 8) for cin, _ in layer_dims)
    CoutL = layer_dims[-1][1]
    taps = tuple((ih - pad) * Wp + (iw - pad)
                 for ih in range(kh) for iw in range(kw))

    # ---- host-built layer-0 frame (one fused XLA pass over a KB tensor) ----
    xm = x * mask
    rows0 = [xm, mask]
    if kpads[0] > Cin0 + 1:
        rows0.append(jnp.zeros((B, kpads[0] - Cin0 - 1, H, W), x.dtype))
    rows0.append(jnp.ones((B, 1, H, W), x.dtype))        # interior indicator
    R0 = kpads[0] + 1
    aug = jnp.concatenate(rows0, axis=1)                 # (B, R0, H, W)
    aug = jnp.pad(aug, ((0, Bpad - B), (0, 0), (pad, pad), (pad, pad)))
    aug = aug.reshape(Bpad, R0, LP)
    aug = jnp.pad(aug, ((0, 0), (0, 0), (0, SEG - LP)))  # (Bpad, R0, SEG)
    aug = aug.reshape(G, Bp, R0, SEG).transpose(0, 2, 1, 3).reshape(G, R0, NW)
    aug = jnp.pad(aug, ((0, 0), (0, 0), (MARG, MARG)))   # (G, R0, FW)

    # ---- fused 2-D augmented weights: (Cout+1, kh*kw*Kpad), MXU-ready LHS ---
    w2ds, bcols = [], []
    for (w, b), kp in zip(params, kpads):
        Cout, Cin = w.shape[0], w.shape[1]
        wt = jnp.transpose(w, (2, 3, 0, 1)).reshape(kh * kw, Cout, Cin)
        wa = jnp.zeros((kh * kw, Cout + 1, kp), x.dtype)
        wa = wa.at[:, :Cout, :Cin].set(wt.astype(x.dtype))
        wa = wa.at[:, Cout, Cin].set(1.0)                # mask ones-kernel row
        w2ds.append(jnp.transpose(wa, (1, 0, 2)).reshape(Cout + 1, kh * kw * kp))
        bcols.append(b.reshape(Cout, 1).astype(jnp.float32))

    kernel = functools.partial(
        _fused_pconv_kernel, layer_dims=layer_dims, kpads=kpads, taps=taps,
        MARG=MARG, NW=NW, winsize=float(kh * kw), activation=activation)

    in_specs = [pl.BlockSpec((1, R0, FW), lambda g: (g, 0, 0))]
    flat_wb = []
    for w2d, bc in zip(w2ds, bcols):
        in_specs.append(pl.BlockSpec(w2d.shape, lambda g: (0, 0)))
        in_specs.append(pl.BlockSpec(bc.shape, lambda g: (0, 0)))
        flat_wb += [w2d, bc]

    out_p = pl.pallas_call(
        kernel,
        out_shape=jax.ShapeDtypeStruct((G, CoutL + 1, NW), x.dtype),
        grid=(G,),
        in_specs=in_specs,
        out_specs=pl.BlockSpec((1, CoutL + 1, NW), lambda g: (g, 0, 0)),
        compiler_params=pltpu.CompilerParams(
            dimension_semantics=("parallel",)),
    )(aug, *flat_wb)

    # ---- unpack: (G, CoutL+1, NW) -> (B, CoutL+1, H, W) ---------------------
    res = out_p.reshape(G, CoutL + 1, Bp, SEG).transpose(0, 2, 1, 3)
    res = res.reshape(Bpad, CoutL + 1, SEG)[:B, :, :LP]
    res = res.reshape(B, CoutL + 1, Hp, Wp)[:, :, pad:pad + H, pad:pad + W]
    return res[:, :CoutL], res[:, CoutL:CoutL + 1]


# ---------------------------------------------------------------------------
# Pure-JAX reference (lax.conv, NCHW) used only to verify the kernel.
# ---------------------------------------------------------------------------
def _ref_layer(x, mask, w, b, pad, apply_act, activation):
    kh, kw = w.shape[2], w.shape[3]
    dn = ("NCHW", "OIHW", "NCHW")
    xm = x * mask
    out = lax.conv_general_dilated(xm, w, (1, 1), ((pad, pad), (pad, pad)),
                                   dimension_numbers=dn)
    ones_w = jnp.ones((1, 1, kh, kw), mask.dtype)
    msum = lax.conv_general_dilated(mask, ones_w, (1, 1),
                                    ((pad, pad), (pad, pad)),
                                    dimension_numbers=dn)
    um = jnp.clip(msum, 0.0, 1.0)
    ratio = float(kh * kw) / (msum + 1e-6) * um
    out = (out * ratio + b.reshape(1, -1, 1, 1)) * um
    if apply_act:
        if activation == "relu":
            out = jax.nn.relu(out)
        elif activation == "leaky_relu":
            out = jax.nn.leaky_relu(out, 0.2)
        elif activation == "gelu":
            out = jax.nn.gelu(out)
    return out, um


def _ref_multilayer(x, mask, params, paddings, activation="relu"):
    if mask is None:
        mask = jnp.ones((x.shape[0], 1) + x.shape[2:], x.dtype)
    n = len(params)
    cur = mask
    for i, ((w, b), p) in enumerate(zip(params, paddings)):
        p = p if isinstance(p, int) else p[0]
        x, cur = _ref_layer(x, cur, w, b, p, i < n - 1, activation)
    return x, cur


if __name__ == "__main__":
    key = jax.random.PRNGKey(0)
    k_x, k_m, k_w1, k_b1, k_w2, k_b2, k_x2, k_m2 = jax.random.split(key, 8)

    # layer_configs equivalent:
    #   [{'in_channels': 4, 'out_channels': 8, 'kernel_size': 3, 'padding': 1},
    #    {'in_channels': 8, 'out_channels': 8, 'kernel_size': 3, 'padding': 1}]
    B, Cin, H, W = 2, 4, 16, 16
    Cmid = 8

    x = jax.random.normal(k_x, (B, Cin, H, W), dtype=jnp.float32)
    mask = (jax.random.uniform(k_m, (B, 1, H, W)) > 0.5).astype(jnp.float32)

    w1 = 0.1 * jax.random.normal(k_w1, (Cmid, Cin, 3, 3), dtype=jnp.float32)
    b1 = 0.1 * jax.random.normal(k_b1, (Cmid,), dtype=jnp.float32)
    w2 = 0.1 * jax.random.normal(k_w2, (Cmid, Cmid, 3, 3), dtype=jnp.float32)
    b2 = 0.1 * jax.random.normal(k_b2, (Cmid,), dtype=jnp.float32)

    params = [(w1, b1), (w2, b2)]
    paddings = [1, 1]

    out, out_mask = multilayer_pconv(x, mask, params, paddings)
    out = jax.block_until_ready(out)
    out_mask = jax.block_until_ready(out_mask)

    ref_out, ref_mask = _ref_multilayer(x, mask, params, paddings)
    np.testing.assert_allclose(np.asarray(out), np.asarray(ref_out),
                               rtol=1e-4, atol=1e-4)
    np.testing.assert_allclose(np.asarray(out_mask), np.asarray(ref_mask),
                               rtol=1e-5, atol=1e-5)

    # Exercise the batch-packing path: B=5 -> 2 grid steps x 3 packed elements
    # (one zero-padded element, sliced away by the wrapper).
    B2 = 5
    x2 = jax.random.normal(k_x2, (B2, Cin, H, W), dtype=jnp.float32)
    mask2 = (jax.random.uniform(k_m2, (B2, 1, H, W)) > 0.5).astype(jnp.float32)
    out2, out_mask2 = multilayer_pconv(x2, mask2, params, paddings)
    out2 = jax.block_until_ready(out2)
    out_mask2 = jax.block_until_ready(out_mask2)
    ref_out2, ref_mask2 = _ref_multilayer(x2, mask2, params, paddings)
    np.testing.assert_allclose(np.asarray(out2), np.asarray(ref_out2),
                               rtol=1e-4, atol=1e-4)
    np.testing.assert_allclose(np.asarray(out_mask2), np.asarray(ref_mask2),
                               rtol=1e-5, atol=1e-5)

    print("KERNEL_OK")
</pallas_src>

<mosaic_0001>
module attributes {stable_mosaic.version = 11 : i64} {
  func.func @_fused_pconv_kernel(%arg0: i32, %arg1: memref<1x9x640xf32, #tpu.memory_space<vmem>>, %arg2: memref<9x72xf32, #tpu.memory_space<vmem>>, %arg3: memref<8x1xf32, #tpu.memory_space<vmem>>, %arg4: memref<9x144xf32, #tpu.memory_space<vmem>>, %arg5: memref<8x1xf32, #tpu.memory_space<vmem>>, %arg6: memref<1x9x384xf32, #tpu.memory_space<vmem>>) attributes {dimension_semantics = [#tpu.dimension_semantics<parallel>], iteration_bounds = array<i64: 2>, scalar_prefetch = 0 : i64, scratch_operands = 0 : i64, tpu.core_type = #tpu.core_type<tc>, window_params = [{transform_indices = @transform_0, window_bounds = array<i64: 1, 9, 640>}, {pipeline_mode = #tpu.pipeline_mode<synchronous>, transform_indices = @transform_1, window_bounds = array<i64: 9, 72>}, {pipeline_mode = #tpu.pipeline_mode<synchronous>, transform_indices = @transform_2, window_bounds = array<i64: 8, 1>}, {pipeline_mode = #tpu.pipeline_mode<synchronous>, transform_indices = @transform_3, window_bounds = array<i64: 9, 144>}, {pipeline_mode = #tpu.pipeline_mode<synchronous>, transform_indices = @transform_4, window_bounds = array<i64: 8, 1>}, {transform_indices = @transform_5, window_bounds = array<i64: 1, 9, 384>}]} {
    %c0 = arith.constant 0 : index
    %c0_0 = arith.constant 0 : index
    %c0_1 = arith.constant 0 : index
    %0 = vector.load %arg1[%c0, %c0_0, %c0_1] : memref<1x9x640xf32, #tpu.memory_space<vmem>>, vector<1x9x640xf32>
    %1 = vector.shape_cast %0 : vector<1x9x640xf32> to vector<9x640xf32>
    %2 = vector.extract_strided_slice %1 {offsets = [0, 0], sizes = [8, 640], strides = [1, 1]} : vector<9x640xf32> to vector<8x640xf32>
    %3 = vector.extract_strided_slice %1 {offsets = [8, 128], sizes = [1, 384], strides = [1, 1]} : vector<9x640xf32> to vector<1x384xf32>
    %4 = vector.extract_strided_slice %2 {offsets = [0, 109], sizes = [8, 384], strides = [1, 1]} : vector<8x640xf32> to vector<8x384xf32>
    %5 = vector.extract_strided_slice %2 {offsets = [0, 110], sizes = [8, 384], strides = [1, 1]} : vector<8x640xf32> to vector<8x384xf32>
    %6 = vector.extract_strided_slice %2 {offsets = [0, 111], sizes = [8, 384], strides = [1, 1]} : vector<8x640xf32> to vector<8x384xf32>
    %7 = vector.extract_strided_slice %2 {offsets = [0, 127], sizes = [8, 384], strides = [1, 1]} : vector<8x640xf32> to vector<8x384xf32>
    %8 = vector.extract_strided_slice %2 {offsets = [0, 128], sizes = [8, 384], strides = [1, 1]} : vector<8x640xf32> to vector<8x384xf32>
    %9 = vector.extract_strided_slice %2 {offsets = [0, 129], sizes = [8, 384], strides = [1, 1]} : vector<8x640xf32> to vector<8x384xf32>
    %10 = vector.extract_strided_slice %2 {offsets = [0, 145], sizes = [8, 384], strides = [1, 1]} : vector<8x640xf32> to vector<8x384xf32>
    %11 = vector.extract_strided_slice %2 {offsets = [0, 146], sizes = [8, 384], strides = [1, 1]} : vector<8x640xf32> to vector<8x384xf32>
    %12 = vector.extract_strided_slice %2 {offsets = [0, 147], sizes = [8, 384], strides = [1, 1]} : vector<8x640xf32> to vector<8x384xf32>
    %13 = tpu.concatenate %4, %5, %6, %7, %8, %9, %10, %11, %12 in 0 : vector<8x384xf32>, vector<8x384xf32>, vector<8x384xf32>, vector<8x384xf32>, vector<8x384xf32>, vector<8x384xf32>, vector<8x384xf32>, vector<8x384xf32>, vector<8x384xf32> -> vector<72x384xf32>
    %c0_2 = arith.constant 0 : index
    %c0_3 = arith.constant 0 : index
    %14 = vector.load %arg2[%c0_2, %c0_3] : memref<9x72xf32, #tpu.memory_space<vmem>>, vector<9x72xf32>
    %cst = arith.constant dense<0.000000e+00> : vector<9x384xf32>
    %15 = tpu.matmul %14, %13, %cst {dimension_numbers = #tpu.dot_dimension_numbers<[1], [0], [0], [1], [0, 0, 1, 1], [], []>} : vector<9x72xf32>, vector<72x384xf32>, vector<9x384xf32> -> vector<9x384xf32>
    %16 = vector.extract_strided_slice %15 {offsets = [0, 0], sizes = [8, 384], strides = [1, 1]} : vector<9x384xf32> to vector<8x384xf32>
    %17 = vector.extract_strided_slice %15 {offsets = [8, 0], sizes = [1, 384], strides = [1, 1]} : vector<9x384xf32> to vector<1x384xf32>
    %cst_4 = arith.constant 0.000000e+00 : f32
    %cst_5 = arith.constant 1.000000e+00 : f32
    %18 = vector.broadcast %cst_4 : f32 to vector<1x384xf32>
    %19 = arith.maximumf %18, %17 : vector<1x384xf32>
    %20 = vector.broadcast %cst_5 : f32 to vector<1x384xf32>
    %21 = arith.minimumf %20, %19 : vector<1x384xf32>
    %cst_6 = arith.constant 9.99999997E-7 : f32
    %22 = vector.broadcast %cst_6 : f32 to vector<1x384xf32>
    %23 = arith.addf %17, %22 : vector<1x384xf32>
    %24 = tpu.reciprocal %23 : vector<1x384xf32> -> vector<1x384xf32>
    %cst_7 = arith.constant 9.000000e+00 : f32
    %25 = vector.broadcast %cst_7 : f32 to vector<1x384xf32>
    %26 = arith.mulf %25, %24 : vector<1x384xf32>
    %27 = arith.mulf %26, %21 : vector<1x384xf32>
    %c0_8 = arith.constant 0 : index
    %c0_9 = arith.constant 0 : index
    %28 = vector.load %arg3[%c0_8, %c0_9] : memref<8x1xf32, #tpu.memory_space<vmem>>, vector<8x1xf32>
    %29 = vector.broadcast %27 : vector<1x384xf32> to vector<8x384xf32>
    %30 = arith.mulf %16, %29 : vector<8x384xf32>
    %31 = vector.broadcast %28 : vector<8x1xf32> to vector<8x384xf32>
    %32 = arith.addf %30, %31 : vector<8x384xf32>
    %33 = vector.broadcast %21 : vector<1x384xf32> to vector<8x384xf32>
    %34 = arith.mulf %32, %33 : vector<8x384xf32>
    %cst_10 = arith.constant 0.000000e+00 : f32
    %35 = vector.broadcast %cst_10 : f32 to vector<8x384xf32>
    %36 = arith.maximumf %34, %35 : vector<8x384xf32>
    %37 = arith.mulf %21, %3 : vector<1x384xf32>
    %38 = vector.broadcast %37 : vector<1x384xf32> to vector<8x384xf32>
    %39 = arith.mulf %36, %38 : vector<8x384xf32>
    %cst_11 = arith.constant 0.000000e+00 : f32
    %40 = vector.broadcast %cst_11 : f32 to vector<7x384xf32>
    %41 = tpu.concatenate %39, %37, %40 in 0 : vector<8x384xf32>, vector<1x384xf32>, vector<7x384xf32> -> vector<16x384xf32>
    %cst_12 = arith.constant 0.000000e+00 : f32
    %42 = vector.broadcast %cst_12 : f32 to vector<16x128xf32>
    %43 = tpu.concatenate %42, %41, %42 in 1 : vector<16x128xf32>, vector<16x384xf32>, vector<16x128xf32> -> vector<16x640xf32>
    %44 = vector.extract_strided_slice %43 {offsets = [0, 109], sizes = [16, 384], strides = [1, 1]} : vector<16x640xf32> to vector<16x384xf32>
    %45 = vector.extract_strided_slice %43 {offsets = [0, 110], sizes = [16, 384], strides = [1, 1]} : vector<16x640xf32> to vector<16x384xf32>
    %46 = vector.extract_strided_slice %43 {offsets = [0, 111], sizes = [16, 384], strides = [1, 1]} : vector<16x640xf32> to vector<16x384xf32>
    %47 = vector.extract_strided_slice %43 {offsets = [0, 127], sizes = [16, 384], strides = [1, 1]} : vector<16x640xf32> to vector<16x384xf32>
    %48 = vector.extract_strided_slice %43 {offsets = [0, 128], sizes = [16, 384], strides = [1, 1]} : vector<16x640xf32> to vector<16x384xf32>
    %49 = vector.extract_strided_slice %43 {offsets = [0, 129], sizes = [16, 384], strides = [1, 1]} : vector<16x640xf32> to vector<16x384xf32>
    %50 = vector.extract_strided_slice %43 {offsets = [0, 145], sizes = [16, 384], strides = [1, 1]} : vector<16x640xf32> to vector<16x384xf32>
    %51 = vector.extract_strided_slice %43 {offsets = [0, 146], sizes = [16, 384], strides = [1, 1]} : vector<16x640xf32> to vector<16x384xf32>
    %52 = vector.extract_strided_slice %43 {offsets = [0, 147], sizes = [16, 384], strides = [1, 1]} : vector<16x640xf32> to vector<16x384xf32>
    %53 = tpu.concatenate %44, %45, %46, %47, %48, %49, %50, %51, %52 in 0 : vector<16x384xf32>, vector<16x384xf32>, vector<16x384xf32>, vector<16x384xf32>, vector<16x384xf32>, vector<16x384xf32>, vector<16x384xf32>, vector<16x384xf32>, vector<16x384xf32> -> vector<144x384xf32>
    %c0_13 = arith.constant 0 : index
    %c0_14 = arith.constant 0 : index
    %54 = vector.load %arg4[%c0_13, %c0_14] : memref<9x144xf32, #tpu.memory_space<vmem>>, vector<9x144xf32>
    %cst_15 = arith.constant dense<0.000000e+00> : vector<9x384xf32>
    %55 = tpu.matmul %54, %53, %cst_15 {dimension_numbers = #tpu.dot_dimension_numbers<[1], [0], [0], [1], [0, 0, 1, 1], [], []>} : vector<9x144xf32>, vector<144x384xf32>, vector<9x384xf32> -> vector<9x384xf32>
    %56 = vector.extract_strided_slice %55 {offsets = [0, 0], sizes = [8, 384], strides = [1, 1]} : vector<9x384xf32> to vector<8x384xf32>
    %57 = vector.extract_strided_slice %55 {offsets = [8, 0], sizes = [1, 384], strides = [1, 1]} : vector<9x384xf32> to vector<1x384xf32>
    %cst_16 = arith.constant 0.000000e+00 : f32
    %cst_17 = arith.constant 1.000000e+00 : f32
    %58 = vector.broadcast %cst_16 : f32 to vector<1x384xf32>
    %59 = arith.maximumf %58, %57 : vector<1x384xf32>
    %60 = vector.broadcast %cst_17 : f32 to vector<1x384xf32>
    %61 = arith.minimumf %60, %59 : vector<1x384xf32>
    %cst_18 = arith.constant 9.99999997E-7 : f32
    %62 = vector.broadcast %cst_18 : f32 to vector<1x384xf32>
    %63 = arith.addf %57, %62 : vector<1x384xf32>
    %64 = tpu.reciprocal %63 : vector<1x384xf32> -> vector<1x384xf32>
    %cst_19 = arith.constant 9.000000e+00 : f32
    %65 = vector.broadcast %cst_19 : f32 to vector<1x384xf32>
    %66 = arith.mulf %65, %64 : vector<1x384xf32>
    %67 = arith.mulf %66, %61 : vector<1x384xf32>
    %c0_20 = arith.constant 0 : index
    %c0_21 = arith.constant 0 : index
    %68 = vector.load %arg5[%c0_20, %c0_21] : memref<8x1xf32, #tpu.memory_space<vmem>>, vector<8x1xf32>
    %69 = vector.broadcast %67 : vector<1x384xf32> to vector<8x384xf32>
    %70 = arith.mulf %56, %69 : vector<8x384xf32>
    %71 = vector.broadcast %68 : vector<8x1xf32> to vector<8x384xf32>
    %72 = arith.addf %70, %71 : vector<8x384xf32>
    %73 = vector.broadcast %61 : vector<1x384xf32> to vector<8x384xf32>
    %74 = arith.mulf %72, %73 : vector<8x384xf32>
    %75 = tpu.concatenate %74, %61 in 0 : vector<8x384xf32>, vector<1x384xf32> -> vector<9x384xf32>
    %c0_22 = arith.constant 0 : index
    %c0_23 = arith.constant 0 : index
    %c0_24 = arith.constant 0 : index
    %76 = vector.load %arg6[%c0_22, %c0_23, %c0_24] : memref<1x9x384xf32, #tpu.memory_space<vmem>>, vector<1x9x384xf32>
    %77 = vector.shape_cast %76 : vector<1x9x384xf32> to vector<9x384xf32>
    %78 = vector.shape_cast %75 : vector<9x384xf32> to vector<1x9x384xf32>
    tpu.vector_store %arg6[%c0_22, %c0_23, %c0_24], %78 {strides = array<i32>} : memref<1x9x384xf32, #tpu.memory_space<vmem>>, vector<1x9x384xf32>,
    return
  }
  func.func @transform_0(%arg0: i32) -> (i32, i32, i32) {
    %c0_i32 = arith.constant 0 : i32
    %c0_i32_0 = arith.constant 0 : i32
    %c0_i32_1 = arith.constant 0 : i32
    return %arg0, %c0_i32, %c0_i32_0 : i32, i32, i32
  }
  func.func @transform_1(%arg0: i32) -> (i32, i32) {
    %c0_i32 = arith.constant 0 : i32
    %c0_i32_0 = arith.constant 0 : i32
    %c0_i32_1 = arith.constant 0 : i32
    return %c0_i32, %c0_i32_0 : i32, i32
  }
  func.func @transform_2(%arg0: i32) -> (i32, i32) {
    %c0_i32 = arith.constant 0 : i32
    %c0_i32_0 = arith.constant 0 : i32
    %c0_i32_1 = arith.constant 0 : i32
    return %c0_i32, %c0_i32_0 : i32, i32
  }
  func.func @transform_3(%arg0: i32) -> (i32, i32) {
    %c0_i32 = arith.constant 0 : i32
    %c0_i32_0 = arith.constant 0 : i32
    %c0_i32_1 = arith.constant 0 : i32
    return %c0_i32, %c0_i32_0 : i32, i32
  }
  func.func @transform_4(%arg0: i32) -> (i32, i32) {
    %c0_i32 = arith.constant 0 : i32
    %c0_i32_0 = arith.constant 0 : i32
    %c0_i32_1 = arith.constant 0 : i32
    return %c0_i32, %c0_i32_0 : i32, i32
  }
  func.func @transform_5(%arg0: i32) -> (i32, i32, i32) {
    %c0_i32 = arith.constant 0 : i32
    %c0_i32_0 = arith.constant 0 : i32
    %c0_i32_1 = arith.constant 0 : i32
    return %arg0, %c0_i32, %c0_i32_0 : i32, i32, i32
  }
}

</mosaic_0001>

<llo_original>
// kernel: tpu_custom_call.1
$region0: #{tpu_custom_call.1}
  #allocation0 [shape = 'u32[]', space=smem, size = 0x4, offset = 0x4, fixed_abs, tag = 'smem constant byte address 0x4 - core index']
  #allocation1 [shape = 'u32[144,128]{1,0:T(1,128)}', space=vmem, size = 0x12000, scoped, tag = 'internal scratch']
  %s0 = inlined_call_operand.vmem [shape: f32[2,9,640], index: 0, kind: input, shape index: {}]
  %s1 = inlined_call_operand.vmem [shape: f32[9,72], index: 1, kind: input, shape index: {}]
  %s2 = inlined_call_operand.vmem [shape: f32[8,1], index: 2, kind: input, shape index: {}]
  %s3 = inlined_call_operand.vmem [shape: f32[9,144], index: 3, kind: input, shape index: {}]
  %s4 = inlined_call_operand.vmem [shape: f32[8,1], index: 4, kind: input, shape index: {}]
  %s5 = inlined_call_operand.vmem [shape: f32[2,9,384], index: 5, kind: output, shape index: {}]
  %s6 = sld [smem:[#allocation0]]
  $region53: #{tpu_custom_call.1} parent=0
    _
  %s8 = ssub.s32 1, %s6
  %s9 = scalar_select 0, %s8, %s6
  loop: start=0, step=1, limit=4
  $region2: #{tpu_custom_call.1} parent=0 // loop_pre_header
    _
  $region3: #{tpu_custom_call.1} parent=0 // loop_header
    %s11 = sphi 0, %s15
    %p12 = scmp.ge.s32.totalorder %s11, 4
    %s21 = sphi 0, %s23
    %s24 = sphi 0, %s21
    %s25 = sphi 0, %s24
    %s41 = sphi 0, %s25
    %s45 = sphi 0, %s45
    %s47 = sphi 0, %s45
    %s48 = sphi 0, %s47
    %s62 = sphi 0, %s48
    %s66 = sphi 0, %s66
    %s68 = sphi 0, %s66
    %s69 = sphi 0, %s68
    %s83 = sphi 0, %s69
    %s87 = sphi 0, %s87
    %s89 = sphi 0, %s87
    %s90 = sphi 0, %s89
    %s104 = sphi 0, %s90
    %s108 = sphi 0, %s108
    %s110 = sphi 0, %s108
    %s111 = sphi 0, %s110
    %s125 = sphi 0, %s111
    %s131 = sphi 0, %s133
    %s134 = sphi 0, %s131
    %s135 = sphi 0, %s134
    %s151 = sphi 0, %s135
  $region4: #{tpu_custom_call.1} parent=0 // loop_header_branch
    %14 = sbr.rel (%p12) target = $region8
  $region5: #{tpu_custom_call.1} parent=0 // loop_body
    %s16 = ssub.s32 %s11, 1
    %s17 = ssub.s32 %s11, 2
    %s18 = sadd.s32 %s11, 1
    %s19 = ssub.s32 %s11, %s18
    %p20 = scmp.eq.s32.totalorder %s19, 0
    %s22 = sadd.s32 %s21, 1
    %s23 = scalar_select %p20, %s21, %s22
    %p26 = pneg %p20
    %p27 = scmp.eq.s32.totalorder %s11, 1
    %p28 = por %p26, %p27
    %p29 = scmp.ne.s32.totalorder %s21, %s24
    %p30 = scmp.eq.s32.totalorder %s11, 0
    %p31 = por %p29, %p30
    %p32 = scmp.ne.s32.totalorder %s21, %s24
    %p33 = scmp.eq.s32.totalorder %s16, 1
    %p34 = por %p32, %p33
    %p35 = scmp.ne.s32.totalorder %s24, %s25
    %p36 = scmp.eq.s32.totalorder %s16, 0
    %p37 = por %p35, %p36
    %p38 = scmp.ne.s32.totalorder %s24, %s25
    %p39 = scmp.eq.s32.totalorder %s17, 1
    %p40 = por %p38, %p39
    %p42 = scmp.ne.s32.totalorder %s25, %s41
    %p43 = scmp.eq.s32.totalorder %s17, 0
    %p44 = por %p42, %p43
    %s46 = sadd.s32 %s45, 1
    %p49 = scmp.eq.s32.totalorder %s11, 1
    %p50 = scmp.ne.s32.totalorder %s45, %s47
    %p51 = scmp.eq.s32.totalorder %s11, 0
    %p52 = por %p50, %p51
    %p53 = scmp.ne.s32.totalorder %s45, %s47
    %p54 = scmp.eq.s32.totalorder %s16, 1
    %p55 = por %p53, %p54
    %p56 = scmp.ne.s32.totalorder %s47, %s48
    %p57 = scmp.eq.s32.totalorder %s16, 0
    %p58 = por %p56, %p57
    %p59 = scmp.ne.s32.totalorder %s47, %s48
    %p60 = scmp.eq.s32.totalorder %s17, 1
    %p61 = por %p59, %p60
    %p63 = scmp.ne.s32.totalorder %s48, %s62
    %p64 = scmp.eq.s32.totalorder %s17, 0
    %p65 = por %p63, %p64
    %s67 = sadd.s32 %s66, 1
    %p70 = scmp.eq.s32.totalorder %s11, 1
    %p71 = scmp.ne.s32.totalorder %s66, %s68
    %p72 = scmp.eq.s32.totalorder %s11, 0
    %p73 = por %p71, %p72
    %p74 = scmp.ne.s32.totalorder %s66, %s68
    %p75 = scmp.eq.s32.totalorder %s16, 1
    %p76 = por %p74, %p75
    %p77 = scmp.ne.s32.totalorder %s68, %s69
    %p78 = scmp.eq.s32.totalorder %s16, 0
    %p79 = por %p77, %p78
    %p80 = scmp.ne.s32.totalorder %s68, %s69
    %p81 = scmp.eq.s32.totalorder %s17, 1
    %p82 = por %p80, %p81
    %p84 = scmp.ne.s32.totalorder %s69, %s83
    %p85 = scmp.eq.s32.totalorder %s17, 0
    %p86 = por %p84, %p85
    %s88 = sadd.s32 %s87, 1
    %p91 = scmp.eq.s32.totalorder %s11, 1
    %p92 = scmp.ne.s32.totalorder %s87, %s89
    %p93 = scmp.eq.s32.totalorder %s11, 0
    %p94 = por %p92, %p93
    %p95 = scmp.ne.s32.totalorder %s87, %s89
    %p96 = scmp.eq.s32.totalorder %s16, 1
    %p97 = por %p95, %p96
    %p98 = scmp.ne.s32.totalorder %s89, %s90
    %p99 = scmp.eq.s32.totalorder %s16, 0
    %p100 = por %p98, %p99
    %p101 = scmp.ne.s32.totalorder %s89, %s90
    %p102 = scmp.eq.s32.totalorder %s17, 1
    %p103 = por %p101, %p102
    %p105 = scmp.ne.s32.totalorder %s90, %s104
    %p106 = scmp.eq.s32.totalorder %s17, 0
    %p107 = por %p105, %p106
    %s109 = sadd.s32 %s108, 1
    %p112 = scmp.eq.s32.totalorder %s11, 1
    %p113 = scmp.ne.s32.totalorder %s108, %s110
    %p114 = scmp.eq.s32.totalorder %s11, 0
    %p115 = por %p113, %p114
    %p116 = scmp.ne.s32.totalorder %s108, %s110
    %p117 = scmp.eq.s32.totalorder %s16, 1
    %p118 = por %p116, %p117
    %p119 = scmp.ne.s32.totalorder %s110, %s111
    %p120 = scmp.eq.s32.totalorder %s16, 0
    %p121 = por %p119, %p120
    %p122 = scmp.ne.s32.totalorder %s110, %s111
    %p123 = scmp.eq.s32.totalorder %s17, 1
    %p124 = por %p122, %p123
    %p126 = scmp.ne.s32.totalorder %s111, %s125
    %p127 = scmp.eq.s32.totalorder %s17, 0
    %p128 = por %p126, %p127
    %s129 = ssub.s32 %s11, %s18
    %p130 = scmp.eq.s32.totalorder %s129, 0
    %s132 = sadd.s32 %s131, 1
    %s133 = scalar_select %p130, %s131, %s132
    %p136 = pneg %p130
    %p137 = scmp.eq.s32.totalorder %s11, 1
    %p138 = por %p136, %p137
    %p139 = scmp.ne.s32.totalorder %s131, %s134
    %p140 = scmp.eq.s32.totalorder %s11, 0
    %p141 = por %p139, %p140
    %p142 = scmp.ne.s32.totalorder %s131, %s134
    %p143 = scmp.eq.s32.totalorder %s16, 1
    %p144 = por %p142, %p143
    %p145 = scmp.ne.s32.totalorder %s134, %s135
    %p146 = scmp.eq.s32.totalorder %s16, 0
    %p147 = por %p145, %p146
    %p148 = scmp.ne.s32.totalorder %s134, %s135
    %p149 = scmp.eq.s32.totalorder %s17, 1
    %p150 = por %p148, %p149
    %p152 = scmp.ne.s32.totalorder %s135, %s151
    %p153 = scmp.eq.s32.totalorder %s17, 0
    %p154 = por %p152, %p153
    %p155 = scmp.le.s32.totalorder 1, %s11
    %p156 = scmp.lt.s32.totalorder %s11, 3
    %p157 = pnand %p155, %p156
    %p158 = pneg %p157
    // Predicated region
    $region9: #{tpu_custom_call.1} parent=5 // pred_check
      _
    $region10: #{tpu_custom_call.1} parent=5 // pred_check_branch
      %160 = sbr.rel (%p157) target = $region12
    $region11: #{tpu_custom_call.1} parent=5 // pred_region
      %s161 = ssub.s32 %s11, 1
      // Predicated region
      $region13: #{tpu_custom_call.1} parent=11 // pred_check
        %p162 = pneg %p58
      $region14: #{tpu_custom_call.1} parent=11 // pred_check_branch
        %164 = sbr.rel (%p162) target = $region16
      $region15: #{tpu_custom_call.1} parent=11 // pred_region
        _
      $region16: #{tpu_custom_call.1} parent=11 // pred_fallthru
        _
      // Predicated region
      $region17: #{tpu_custom_call.1} parent=11 // pred_check
        %p165 = pneg %p79
      $region18: #{tpu_custom_call.1} parent=11 // pred_check_branch
        %167 = sbr.rel (%p165) target = $region20
      $region19: #{tpu_custom_call.1} parent=11 // pred_region
        _
      $region20: #{tpu_custom_call.1} parent=11 // pred_fallthru
        _
      // Predicated region
      $region21: #{tpu_custom_call.1} parent=11 // pred_check
        %p168 = pneg %p100
      $region22: #{tpu_custom_call.1} parent=11 // pred_check_branch
        %170 = sbr.rel (%p168) target = $region24
      $region23: #{tpu_custom_call.1} parent=11 // pred_region
        _
      $region24: #{tpu_custom_call.1} parent=11 // pred_fallthru
        _
      // Predicated region
      $region25: #{tpu_custom_call.1} parent=11 // pred_check
        %p171 = pneg %p121
      $region26: #{tpu_custom_call.1} parent=11 // pred_check_branch
        %173 = sbr.rel (%p171) target = $region28
      $region27: #{tpu_custom_call.1} parent=11 // pred_region
        _
      $region28: #{tpu_custom_call.1} parent=11 // pred_fallthru
        _
    $region12: #{tpu_custom_call.1} parent=5 // pred_fallthru
      _
    %p174 = scmp.lt.s32.totalorder %s11, 2
    // Predicated region
    $region29: #{tpu_custom_call.1} parent=5 // pred_check
      %p175 = pneg %p174
    $region30: #{tpu_custom_call.1} parent=5 // pred_check_branch
      %177 = sbr.rel (%p175) target = $region32
    $region31: #{tpu_custom_call.1} parent=5 // pred_region
      // Predicated region
      $region33: #{tpu_custom_call.1} parent=31 // pred_check
        %p178 = pneg %p31
      $region34: #{tpu_custom_call.1} parent=31 // pred_check_branch
        %180 = sbr.rel (%p178) target = $region36
      $region35: #{tpu_custom_call.1} parent=31 // pred_region
        %p181 = scmp.lt.s32.totalorder %s11, 1
        %s182 = scalar_select %p181, %s11, 1
        %s183 = smul.addr %s182, 10
        %s184 = smul.addr %s183, 8
        %s185 = scalar_lea.vmem %s0, %s184
      $region36: #{tpu_custom_call.1} parent=31 // pred_fallthru
        _
    $region32: #{tpu_custom_call.1} parent=5 // pred_fallthru
      _
    %p186 = scmp.le.s32.totalorder 1, %s11
    %p187 = scmp.lt.s32.totalorder %s11, 3
    %p188 = pnand %p186, %p187
    %p189 = pneg %p188
    // Predicated region
    $region37: #{tpu_custom_call.1} parent=5 // pred_check
      _
    $region38: #{tpu_custom_call.1} parent=5 // pred_check_branch
      %191 = sbr.rel (%p188) target = $region40
    $region39: #{tpu_custom_call.1} parent=5 // pred_region
      %s192 = ssub.s32 %s11, 1
      %p193 = scmp.lt.s32.totalorder %s16, 1
      %s194 = scalar_select %p193, %s16, 1
      %s195 = smul.addr %s194, 10
      %s196 = smul.addr %s195, 8
      %s197 = scalar_lea.vmem %s0, %s196
      %p198 = pneg %p37
      %p199 = pneg %p34
      %p200 = pneg %p58
      %p201 = pneg %p55
      %p202 = pneg %p79
      %p203 = pneg %p76
      %p204 = pneg %p100
      %p205 = pneg %p97
      %p206 = pneg %p121
      %p207 = pneg %p118
      %p208 = pneg %p147
      %p209 = pneg %p144
      %p210 = scmp.lt.s32.totalorder %s16, 1
      %s211 = scalar_select %p210, %s16, 1
      %s212 = smul.addr %s211, 6
      %s213 = smul.addr %s212, 8
      %s214 = scalar_lea.vmem %s5, %s213
      %p215 = scmp.lt.s32.totalorder %s16, 1
      %s216 = scalar_select %p215, %s16, 1
      %s217 = smul.addr %s216, 10
      %s218 = smul.addr %s217, 8
      %s219 = scalar_lea.vmem %s0, %s218
      %p220 = scmp.lt.s32.totalorder %s16, 1
      %s221 = scalar_select %p220, %s16, 1
      %s222 = smul.addr %s221, 6
      %s223 = smul.addr %s222, 8
      %s224 = scalar_lea.vmem %s5, %s223
      %v225 = vld [vmem:[%s219] sm:$0xff]
      %v226 = vld [vmem:[%s219 + $0x8] sm:$0xff]
      %v227 = vld [vmem:[%s219 + $0x10] sm:$0xff]
      %v228 = vld [vmem:[%s219 + $0x18] sm:$0xff]
      %v229 = vld [vmem:[%s219 + $0x20] sm:$0xff]
      %v230 = vld [vmem:[%s219 + $0x30] sm:$0x1]
      %v231 = vld [vmem:[%s219 + $0x38] sm:$0x1]
      %v232 = vld [vmem:[%s219 + $0x40] sm:$0x1]
      %237 = vrot.lane.b32.xlu0 %v225, 127
      %v238 = vpop.permute.xlu0 %237
      %239 = vrot.lane.b32.xlu0 %v226, 127
      %v240 = vpop.permute.xlu0 %239
      %241 = vrot.lane.b32.xlu0 %v227, 127
      %v242 = vpop.permute.xlu0 %241
      %243 = vrot.lane.b32.xlu0 %v228, 127
      %v244 = vpop.permute.xlu0 %243
      %vm245 = vcmask 1039360
      %v246 = vsel %vm245, %v238, %v240
      %v247 = vsel %vm245, %v240, %v242
      %v248 = vsel %vm245, %v242, %v244
      %249 = vrot.lane.b32.xlu0 %v225, 126
      %v250 = vpop.permute.xlu0 %249
      %251 = vrot.lane.b32.xlu0 %v226, 126
      %v252 = vpop.permute.xlu0 %251
      %253 = vrot.lane.b32.xlu0 %v227, 126
      %v254 = vpop.permute.xlu0 %253
      %255 = vrot.lane.b32.xlu0 %v228, 126
      %v256 = vpop.permute.xlu0 %255
      %vm257 = vcmask 1031168
      %v258 = vsel %vm257, %v250, %v252
      %v259 = vsel %vm257, %v252, %v254
      %v260 = vsel %vm257, %v254, %v256
      %261 = vrot.lane.b32.xlu0 %v225, 110
      %v262 = vpop.permute.xlu0 %261
      %263 = vrot.lane.b32.xlu0 %v226, 110
      %v264 = vpop.permute.xlu0 %263
      %265 = vrot.lane.b32.xlu0 %v227, 110
      %v266 = vpop.permute.xlu0 %265
      %267 = vrot.lane.b32.xlu0 %v228, 110
      %v268 = vpop.permute.xlu0 %267
      %vm269 = vcmask 900096
      %v270 = vsel %vm269, %v262, %v264
      %v271 = vsel %vm269, %v264, %v266
      %v272 = vsel %vm269, %v266, %v268
      %273 = vrot.lane.b32.xlu0 %v226, 109
      %v274 = vpop.permute.xlu0 %273
      %275 = vrot.lane.b32.xlu0 %v227, 109
      %v276 = vpop.permute.xlu0 %275
      %277 = vrot.lane.b32.xlu0 %v228, 109
      %v278 = vpop.permute.xlu0 %277
      %vm279 = vcmask 891904
      %v280 = vsel %vm279, %v274, %v276
      %v281 = vsel %vm279, %v276, %v278
      %283 = vrot.lane.b32.xlu0 %v226, 108
      %v284 = vpop.permute.xlu0 %283
      %285 = vrot.lane.b32.xlu0 %v227, 108
      %v286 = vpop.permute.xlu0 %285
      %287 = vrot.lane.b32.xlu0 %v228, 108
      %v288 = vpop.permute.xlu0 %287
      %289 = vrot.lane.b32.xlu0 %v229, 108
      %v290 = vpop.permute.xlu0 %289
      %vm291 = vcmask 883712
      %v292 = vsel %vm291, %v284, %v286
      %v293 = vsel %vm291, %v286, %v288
      %v294 = vsel %vm291, %v288, %v290
      %295 = vrot.lane.b32.xlu0 %v226, 92
      %v296 = vpop.permute.xlu0 %295
      %297 = vrot.lane.b32.xlu0 %v227, 92
      %v298 = vpop.permute.xlu0 %297
      %299 = vrot.lane.b32.xlu0 %v228, 92
      %v300 = vpop.permute.xlu0 %299
      %301 = vrot.lane.b32.xlu0 %v229, 92
      %v302 = vpop.permute.xlu0 %301
      %vm303 = vcmask 752640
      %v304 = vsel %vm303, %v296, %v298
      %v305 = vsel %vm303, %v298, %v300
      %v306 = vsel %vm303, %v300, %v302
      %307 = vrot.lane.b32.xlu0 %v226, 91
      %v308 = vpop.permute.xlu0 %307
      %309 = vrot.lane.b32.xlu0 %v227, 91
      %v310 = vpop.permute.xlu0 %309
      %311 = vrot.lane.b32.xlu0 %v228, 91
      %v312 = vpop.permute.xlu0 %311
      %313 = vrot.lane.b32.xlu0 %v229, 91
      %v314 = vpop.permute.xlu0 %313
      %vm315 = vcmask 744448
      %v316 = vsel %vm315, %v308, %v310
      %v317 = vsel %vm315, %v310, %v312
      %v318 = vsel %vm315, %v312, %v314
      %319 = vrot.lane.b32.xlu0 %v226, 90
      %v320 = vpop.permute.xlu0 %319
      %321 = vrot.lane.b32.xlu0 %v227, 90
      %v322 = vpop.permute.xlu0 %321
      %323 = vrot.lane.b32.xlu0 %v228, 90
      %v324 = vpop.permute.xlu0 %323
      %325 = vrot.lane.b32.xlu0 %v229, 90
      %v326 = vpop.permute.xlu0 %325
      %vm327 = vcmask 736256
      %v328 = vsel %vm327, %v320, %v322
      %v329 = vsel %vm327, %v322, %v324
      %v330 = vsel %vm327, %v324, %v326
      %v331 = vld [vmem:[%s1] sm:$0xff]
      %v332 = vld [vmem:[%s1 + $0x8] sm:$0x1]
      %333 = vrot.lane.b32.xlu0 %v225, 19
      %v334 = vpop.permute.xlu0 %333
      %335 = vrot.lane.b32.xlu0 %v226, 19
      %v336 = vpop.permute.xlu0 %335
      %337 = vrot.lane.b32.xlu0 %v227, 19
      %v338 = vpop.permute.xlu0 %337
      %339 = vrot.lane.b32.xlu0 %v228, 19
      %v340 = vpop.permute.xlu0 %339
      %341 = vrot.lane.b32.xlu0 %v246, 19
      %v342 = vpop.permute.xlu0 %341
      %343 = vrot.lane.b32.xlu0 %v247, 19
      %v344 = vpop.permute.xlu0 %343
      %345 = vrot.lane.b32.xlu0 %v248, 19
      %v346 = vpop.permute.xlu0 %345
      %347 = vrot.lane.b32.xlu0 %v244, 19
      %v348 = vpop.permute.xlu0 %347
      %349 = vrot.lane.b32.xlu0 %v258, 19
      %v350 = vpop.permute.xlu0 %349
      %351 = vrot.lane.b32.xlu0 %v259, 19
      %v352 = vpop.permute.xlu0 %351
      %353 = vrot.lane.b32.xlu0 %v260, 19
      %v354 = vpop.permute.xlu0 %353
      %355 = vrot.lane.b32.xlu0 %v256, 19
      %v356 = vpop.permute.xlu0 %355
      %357 = vrot.lane.b32.xlu0 %v270, 19
      %v358 = vpop.permute.xlu0 %357
      %359 = vrot.lane.b32.xlu0 %v271, 19
      %v360 = vpop.permute.xlu0 %359
      %361 = vrot.lane.b32.xlu0 %v272, 19
      %v362 = vpop.permute.xlu0 %361
      %363 = vrot.lane.b32.xlu0 %v268, 19
      %v364 = vpop.permute.xlu0 %363
      %365 = vrot.lane.b32.xlu0 %v274, 19
      %v366 = vpop.permute.xlu0 %365
      %367 = vrot.lane.b32.xlu0 %v280, 19
      %v368 = vpop.permute.xlu0 %367
      %369 = vrot.lane.b32.xlu0 %v281, 19
      %v370 = vpop.permute.xlu0 %369
      %371 = vrot.lane.b32.xlu0 %v278, 19
      %v372 = vpop.permute.xlu0 %371
      %373 = vrot.lane.b32.xlu0 %v284, 19
      %v374 = vpop.permute.xlu0 %373
      %375 = vrot.lane.b32.xlu0 %v292, 19
      %v376 = vpop.permute.xlu0 %375
      %377 = vrot.lane.b32.xlu0 %v293, 19
      %v378 = vpop.permute.xlu0 %377
      %379 = vrot.lane.b32.xlu0 %v294, 19
      %v380 = vpop.permute.xlu0 %379
      %381 = vrot.lane.b32.xlu0 %v296, 19
      %v382 = vpop.permute.xlu0 %381
      %383 = vrot.lane.b32.xlu0 %v304, 19
      %v384 = vpop.permute.xlu0 %383
      %385 = vrot.lane.b32.xlu0 %v305, 19
      %v386 = vpop.permute.xlu0 %385
      %387 = vrot.lane.b32.xlu0 %v306, 19
      %v388 = vpop.permute.xlu0 %387
      %389 = vrot.lane.b32.xlu0 %v308, 19
      %v390 = vpop.permute.xlu0 %389
      %391 = vrot.lane.b32.xlu0 %v316, 19
      %v392 = vpop.permute.xlu0 %391
      %393 = vrot.lane.b32.xlu0 %v317, 19
      %v394 = vpop.permute.xlu0 %393
      %395 = vrot.lane.b32.xlu0 %v318, 19
      %v396 = vpop.permute.xlu0 %395
      %397 = vrot.lane.b32.xlu0 %v320, 19
      %v398 = vpop.permute.xlu0 %397
      %399 = vrot.lane.b32.xlu0 %v328, 19
      %v400 = vpop.permute.xlu0 %399
      %401 = vrot.lane.b32.xlu0 %v329, 19
      %v402 = vpop.permute.xlu0 %401
      %403 = vrot.lane.b32.xlu0 %v330, 19
      %v404 = vpop.permute.xlu0 %403
      %vm405 = vcmask 154624
      %v406 = vsel %vm405, %v334, %v336
      %v407 = vsel %vm405, %v336, %v338
      %v408 = vsel %vm405, %v338, %v340
      %v409 = vsel %vm405, %v342, %v344
      %v410 = vsel %vm405, %v344, %v346
      %v411 = vsel %vm405, %v346, %v348
      %v412 = vsel %vm405, %v350, %v352
      %v413 = vsel %vm405, %v352, %v354
      %v414 = vsel %vm405, %v354, %v356
      %v415 = vsel %vm405, %v358, %v360
      %v416 = vsel %vm405, %v360, %v362
      %v417 = vsel %vm405, %v362, %v364
      %v418 = vsel %vm405, %v366, %v368
      %v419 = vsel %vm405, %v368, %v370
      %v420 = vsel %vm405, %v370, %v372
      %v421 = vsel %vm405, %v374, %v376
      %v422 = vsel %vm405, %v376, %v378
      %v423 = vsel %vm405, %v378, %v380
      %v424 = vsel %vm405, %v382, %v384
      %v425 = vsel %vm405, %v384, %v386
      %v426 = vsel %vm405, %v386, %v388
      %v427 = vsel %vm405, %v390, %v392
      %v428 = vsel %vm405, %v392, %v394
      %v429 = vsel %vm405, %v394, %v396
      %v430 = vsel %vm405, %v398, %v400
      %v431 = vsel %vm405, %v400, %v402
      %v432 = vsel %vm405, %v402, %v404
      %vm460 = vcmask 588800
      %v462 = vsel %vm460, %v331, 0
      %v465 = vsel %vm460, %v332, 0
      %467 = vmatprep.subr.mxu0 %v407
      %468 = vmatpush1.msra.mxu0 %v406
      %469 = vmatprep.subr.mxu0 %v410
      %470 = vmatpush1.msra.mxu0 %v409
      %471 = vmatprep.subr.mxu0 %v413
      %472 = vmatpush1.msra.mxu0 %v412
      %473 = vmatprep.subr.mxu0 %v416
      %474 = vmatpush1.msra.mxu0 %v415
      %475 = vmatprep.subr.mxu0 %v419
      %476 = vmatpush1.msra.mxu0 %v418
      %477 = vmatprep.subr.mxu0 %v422
      %478 = vmatpush1.msra.mxu0 %v421
      %479 = vmatprep.subr.mxu0 %v425
      %480 = vmatpush1.msra.mxu0 %v424
      %481 = vmatprep.subr.mxu0 %v428
      %482 = vmatpush1.msra.mxu0 %v427
      %483 = vmatprep.subr.mxu0 %v431
      %484 = vmatpush1.msra.mxu0 %v430
      %485 = vmatprep.subr.mxu0 0.0
      %486 = vmatpush1.msra.mxu0 0.0
      %487 = vmatprep.subr.mxu0 0.0
      %488 = vmatpush1.msra.mxu0 0.0
      %489 = vmatprep.subr.mxu0 0.0
      %490 = vmatpush1.msra.mxu0 0.0
      %491 = vmatprep.subr.mxu0 0.0
      %492 = vmatpush1.msra.mxu0 0.0
      %493 = vmatprep.subr.mxu0 0.0
      %494 = vmatpush1.msra.mxu0 0.0
      %495 = vmatprep.subr.mxu0 0.0
      %496 = vmatpush1.msra.mxu0 0.0
      %497 = vmatprep.subr.mxu0 0.0
      %498 = vmatpush1.msra.mxu0 0.0
      %499 = vmatprep.subr.mxu0 0.0
      %500 = vmatpush1.msra.mxu0 0.0
      %501 = vmatprep.subr.mxu0 0.0
      %502 = vmatpush1.msra.mxu0 0.0
      %503 = vmatprep.subr.mxu0 0.0
      %504 = vmatpush1.msra.mxu0 0.0
      %505 = vmatprep.subr.mxu0 0.0
      %506 = vmatpush1.msra.mxu0 0.0
      %507 = vmatprep.subr.mxu0 0.0
      %508 = vmatpush1.msra.mxu0 0.0
      %509 = vmatprep.subr.mxu0 0.0
      %510 = vmatpush1.msra.mxu0 0.0
      %511 = vmatprep.subr.mxu0 0.0
      %512 = vmatpush1.msra.mxu0 0.0
      %513 = vmatprep.subr.mxu0 0.0
      %514 = vmatpush1.msra.mxu0 0.0
      %515 = vmatprep.subr.mxu0 0.0
      %516 = vmatpush1.msra.mxu0 0.0
      %517 = vmatprep.subr.mxu0 0.0
      %518 = vmatpush1.msra.mxu0 0.0
      %519 = vmatprep.subr.mxu0 0.0
      %520 = vmatpush1.msra.mxu0 0.0
      %521 = vmatprep.subr.mxu0 0.0
      %522 = vmatpush1.msra.mxu0 0.0
      %523 = vmatprep.subr.mxu0 0.0
      %524 = vmatpush1.msra.mxu0 0.0
      %525 = vmatprep.subr.mxu0 0.0
      %526 = vmatpush1.msra.mxu0 0.0
      %527 = vmatprep.subr.mxu0 0.0
      %528 = vmatpush1.msra.mxu0 0.0
      %529 = vmatprep.subr.mxu0 0.0
      %530 = vmatpush1.msra.mxu0 0.0
      %531 = vmatprep.mubr.f32.mxu0 0.0
      %532 = vmatmul.mubr.f32.gmra.mrb[0].mxu0 %v462
      %v533 = vpop.f32.mrb[0].mxu0
      %v534 = vadd.f32 0.0, %v533
      %v535 = vpop.f32.mrb[0].mxu0
      %v536 = vadd.f32 0.0, %v535
      %537 = vmatprep.mubr.f32.mxu0 0.0
      %538 = vmatmul.mubr.f32.gmra.mrb[0].mxu0 %v465
      %v539 = vpop.f32.mrb[0].mxu0
      %v540 = vadd.f32 0.0, %v539
      %v541 = vpop.f32.mrb[0].mxu0
      %v542 = vadd.f32 0.0, %v541
      %543 = vdwg.mxu0
      %544 = vmatprep.subr.mxu0 0.0
      %545 = vmatpush1.msra.mxu0 %v408
      %546 = vmatprep.subr.mxu0 0.0
      %547 = vmatpush1.msra.mxu0 %v411
      %548 = vmatprep.subr.mxu0 0.0
      %549 = vmatpush1.msra.mxu0 %v414
      %550 = vmatprep.subr.mxu0 0.0
      %551 = vmatpush1.msra.mxu0 %v417
      %552 = vmatprep.subr.mxu0 0.0
      %553 = vmatpush1.msra.mxu0 %v420
      %554 = vmatprep.subr.mxu0 0.0
      %555 = vmatpush1.msra.mxu0 %v423
      %556 = vmatprep.subr.mxu0 0.0
      %557 = vmatpush1.msra.mxu0 %v426
      %558 = vmatprep.subr.mxu0 0.0
      %559 = vmatpush1.msra.mxu0 %v429
      %560 = vmatprep.subr.mxu0 0.0
      %561 = vmatpush1.msra.mxu0 %v432
      %562 = vmatprep.subr.mxu0 0.0
      %563 = vmatpush1.msra.mxu0 0.0
      %564 = vmatprep.subr.mxu0 0.0
      %565 = vmatpush1.msra.mxu0 0.0
      %566 = vmatprep.subr.mxu0 0.0
      %567 = vmatpush1.msra.mxu0 0.0
      %568 = vmatprep.subr.mxu0 0.0
      %569 = vmatpush1.msra.mxu0 0.0
      %570 = vmatprep.subr.mxu0 0.0
      %571 = vmatpush1.msra.mxu0 0.0
      %572 = vmatprep.subr.mxu0 0.0
      %573 = vmatpush1.msra.mxu0 0.0
      %574 = vmatprep.subr.mxu0 0.0
      %575 = vmatpush1.msra.mxu0 0.0
      %576 = vmatprep.subr.mxu0 0.0
      %577 = vmatpush1.msra.mxu0 0.0
      %578 = vmatprep.subr.mxu0 0.0
      %579 = vmatpush1.msra.mxu0 0.0
      %580 = vmatprep.subr.mxu0 0.0
      %581 = vmatpush1.msra.mxu0 0.0
      %582 = vmatprep.subr.mxu0 0.0
      %583 = vmatpush1.msra.mxu0 0.0
      %584 = vmatprep.subr.mxu0 0.0
      %585 = vmatpush1.msra.mxu0 0.0
      %586 = vmatprep.subr.mxu0 0.0
      %587 = vmatpush1.msra.mxu0 0.0
      %588 = vmatprep.subr.mxu0 0.0
      %589 = vmatpush1.msra.mxu0 0.0
      %590 = vmatprep.subr.mxu0 0.0
      %591 = vmatpush1.msra.mxu0 0.0
      %592 = vmatprep.subr.mxu0 0.0
      %593 = vmatpush1.msra.mxu0 0.0
      %594 = vmatprep.subr.mxu0 0.0
      %595 = vmatpush1.msra.mxu0 0.0
      %596 = vmatprep.subr.mxu0 0.0
      %597 = vmatpush1.msra.mxu0 0.0
      %598 = vmatprep.subr.mxu0 0.0
      %599 = vmatpush1.msra.mxu0 0.0
      %600 = vmatprep.subr.mxu0 0.0
      %601 = vmatpush1.msra.mxu0 0.0
      %602 = vmatprep.subr.mxu0 0.0
      %603 = vmatpush1.msra.mxu0 0.0
      %604 = vmatprep.subr.mxu0 0.0
      %605 = vmatpush1.msra.mxu0 0.0
      %606 = vmatprep.subr.mxu0 0.0
      %607 = vmatpush1.msra.mxu0 0.0
      %608 = vmatprep.mubr.f32.mxu0 0.0
      %609 = vmatmul.mubr.f32.gmra.mrb[0].mxu0 %v462
      %v610 = vpop.f32.mrb[0].mxu0
      %v611 = vadd.f32 0.0, %v610
      %v612 = vpop.f32.mrb[0].mxu0
      %613 = vmatprep.mubr.f32.mxu0 0.0
      %614 = vmatmul.mubr.f32.gmra.mrb[0].mxu0 %v465
      %v615 = vpop.f32.mrb[0].mxu0
      %v616 = vadd.f32 0.0, %v615
      %v617 = vpop.f32.mrb[0].mxu0
      %618 = vdwg.mxu0
      %v619 = vmax.f32 %v540, 0.0
      %v620 = vmax.f32 %v542, 0.0
      %v621 = vmax.f32 %v616, 0.0
      %v622 = vmin.f32 %v619, 1.0
      %v623 = vmin.f32 %v620, 1.0
      %v624 = vmin.f32 %v621, 1.0
      %v625 = vadd.f32 %v540, 1e-06
      %v626 = vadd.f32 %v542, 1e-06
      %v627 = vadd.f32 %v616, 1e-06
      %v628 = vrcp.pop %v625
      %v629 = vrcp.pop %v626
      %v630 = vrcp.pop %v627
      %v631 = vmul.f32 %v628, 9.0
      %v632 = vmul.f32 %v629, 9.0
      %v633 = vmul.f32 %v630, 9.0
      %v634 = vmul.f32 %v631, %v622
      %v635 = vmul.f32 %v632, %v623
      %v636 = vmul.f32 %v633, %v624
      %v637 = vld [vmem:[%s2] sm:$0xff]
      %v638 = vlaneseq
      %v639 = vshrl.u32 %v638, 7
      %v640 = vsub.s32 0, %v639
      %v641 = vrot.slane %v634, %v640
      %v642 = vlaneseq
      %v643 = vshrl.u32 %v642, 7
      %v644 = vsub.s32 0, %v643
      %v645 = vrot.slane %v635, %v644
      %v646 = vlaneseq
      %v647 = vshrl.u32 %v646, 7
      %v648 = vsub.s32 0, %v647
      %v649 = vrot.slane %v636, %v648
      %v650 = vmul.f32 %v534, %v641
      %v651 = vmul.f32 %v536, %v645
      %v652 = vmul.f32 %v611, %v649
      %654 = vset.pattern.permute.xlu0 0
      %655 = vperm.xlu0 %654, %v637
      %v656 = vpop.permute.xlu0 %655
      %v658 = vadd.f32 %v650, %v656
      %v659 = vadd.f32 %v651, %v656
      %v660 = vadd.f32 %v652, %v656
      %v661 = vlaneseq
      %v662 = vshrl.u32 %v661, 7
      %v663 = vsub.s32 0, %v662
      %v664 = vrot.slane %v622, %v663
      %v665 = vlaneseq
      %v666 = vshrl.u32 %v665, 7
      %v667 = vsub.s32 0, %v666
      %v668 = vrot.slane %v623, %v667
      %v669 = vlaneseq
      %v670 = vshrl.u32 %v669, 7
      %v671 = vsub.s32 0, %v670
      %v672 = vrot.slane %v624, %v671
      %v673 = vmul.f32 %v658, %v664
      %v674 = vmul.f32 %v659, %v668
      %v675 = vmul.f32 %v660, %v672
      %v676 = vmax.f32 %v673, 0.0
      %v677 = vmax.f32 %v674, 0.0
      %v678 = vmax.f32 %v675, 0.0
      %v679 = vmul.f32 %v622, %v230
      %v680 = vmul.f32 %v623, %v231
      %v681 = vmul.f32 %v624, %v232
      %v682 = vlaneseq
      %v683 = vshrl.u32 %v682, 7
      %v684 = vsub.s32 0, %v683
      %v685 = vrot.slane %v679, %v684
      %v686 = vlaneseq
      %v687 = vshrl.u32 %v686, 7
      %v688 = vsub.s32 0, %v687
      %v689 = vrot.slane %v680, %v688
      %v690 = vlaneseq
      %v691 = vshrl.u32 %v690, 7
      %v692 = vsub.s32 0, %v691
      %v693 = vrot.slane %v681, %v692
      %v694 = vmul.f32 %v676, %v685
      %v695 = vmul.f32 %v677, %v689
      %v696 = vmul.f32 %v678, %v693
      %vm697 = vcmask 1040384
      %v698 = vsel %vm697, %v679, 0.0
      %v699 = vsel %vm697, %v680, 0.0
      %v700 = vsel %vm697, %v681, 0.0
      %708 = vrot.lane.b32.xlu0 0.0, 127
      %v709 = vpop.permute.xlu0 %708
      %710 = vrot.lane.b32.xlu0 %v694, 127
      %v711 = vpop.permute.xlu0 %710
      %712 = vrot.lane.b32.xlu0 %v695, 127
      %v713 = vpop.permute.xlu0 %712
      %714 = vrot.lane.b32.xlu0 %v696, 127
      %v715 = vpop.permute.xlu0 %714
      %716 = vrot.lane.b32.xlu0 %v698, 127
      %v717 = vpop.permute.xlu0 %716
      %718 = vrot.lane.b32.xlu0 %v699, 127
      %v719 = vpop.permute.xlu0 %718
      %720 = vrot.lane.b32.xlu0 %v700, 127
      %v721 = vpop.permute.xlu0 %720
      %v722 = vsel %vm245, %v709, %v711
      %v723 = vsel %vm245, %v711, %v713
      %v724 = vsel %vm245, %v713, %v715
      %v725 = vsel %vm245, %v709, %v717
      %v726 = vsel %vm245, %v717, %v719
      %v727 = vsel %vm245, %v719, %v721
      %728 = vrot.lane.b32.xlu0 0.0, 126
      %v729 = vpop.permute.xlu0 %728
      %730 = vrot.lane.b32.xlu0 %v694, 126
      %v731 = vpop.permute.xlu0 %730
      %732 = vrot.lane.b32.xlu0 %v695, 126
      %v733 = vpop.permute.xlu0 %732
      %734 = vrot.lane.b32.xlu0 %v696, 126
      %v735 = vpop.permute.xlu0 %734
      %736 = vrot.lane.b32.xlu0 %v698, 126
      %v737 = vpop.permute.xlu0 %736
      %738 = vrot.lane.b32.xlu0 %v699, 126
      %v739 = vpop.permute.xlu0 %738
      %740 = vrot.lane.b32.xlu0 %v700, 126
      %v741 = vpop.permute.xlu0 %740
      %v742 = vsel %vm257, %v729, %v731
      %v743 = vsel %vm257, %v731, %v733
      %v744 = vsel %vm257, %v733, %v735
      %v745 = vsel %vm257, %v729, %v737
      %v746 = vsel %vm257, %v737, %v739
      %v747 = vsel %vm257, %v739, %v741
      %748 = vrot.lane.b32.xlu0 0.0, 110
      %v749 = vpop.permute.xlu0 %748
      %750 = vrot.lane.b32.xlu0 %v694, 110
      %v751 = vpop.permute.xlu0 %750
      %752 = vrot.lane.b32.xlu0 %v695, 110
      %v753 = vpop.permute.xlu0 %752
      %754 = vrot.lane.b32.xlu0 %v696, 110
      %v755 = vpop.permute.xlu0 %754
      %756 = vrot.lane.b32.xlu0 %v698, 110
      %v757 = vpop.permute.xlu0 %756
      %758 = vrot.lane.b32.xlu0 %v699, 110
      %v759 = vpop.permute.xlu0 %758
      %760 = vrot.lane.b32.xlu0 %v700, 110
      %v761 = vpop.permute.xlu0 %760
      %v762 = vsel %vm269, %v749, %v751
      %v763 = vsel %vm269, %v751, %v753
      %v764 = vsel %vm269, %v753, %v755
      %v765 = vsel %vm269, %v749, %v757
      %v766 = vsel %vm269, %v757, %v759
      %v767 = vsel %vm269, %v759, %v761
      %768 = vrot.lane.b32.xlu0 %v694, 109
      %v769 = vpop.permute.xlu0 %768
      %770 = vrot.lane.b32.xlu0 %v695, 109
      %v771 = vpop.permute.xlu0 %770
      %772 = vrot.lane.b32.xlu0 %v696, 109
      %v773 = vpop.permute.xlu0 %772
      %774 = vrot.lane.b32.xlu0 %v698, 109
      %v775 = vpop.permute.xlu0 %774
      %776 = vrot.lane.b32.xlu0 %v699, 109
      %v777 = vpop.permute.xlu0 %776
      %778 = vrot.lane.b32.xlu0 %v700, 109
      %v779 = vpop.permute.xlu0 %778
      %v780 = vsel %vm279, %v769, %v771
      %v781 = vsel %vm279, %v771, %v773
      %v782 = vsel %vm279, %v775, %v777
      %v783 = vsel %vm279, %v777, %v779
      %784 = vrot.lane.b32.xlu0 %v694, 108
      %v785 = vpop.permute.xlu0 %784
      %786 = vrot.lane.b32.xlu0 %v695, 108
      %v787 = vpop.permute.xlu0 %786
      %788 = vrot.lane.b32.xlu0 %v696, 108
      %v789 = vpop.permute.xlu0 %788
      %790 = vrot.lane.b32.xlu0 0.0, 108
      %v791 = vpop.permute.xlu0 %790
      %792 = vrot.lane.b32.xlu0 %v698, 108
      %v793 = vpop.permute.xlu0 %792
      %794 = vrot.lane.b32.xlu0 %v699, 108
      %v795 = vpop.permute.xlu0 %794
      %796 = vrot.lane.b32.xlu0 %v700, 108
      %v797 = vpop.permute.xlu0 %796
      %v798 = vsel %vm291, %v785, %v787
      %v799 = vsel %vm291, %v787, %v789
      %v800 = vsel %vm291, %v789, %v791
      %v801 = vsel %vm291, %v793, %v795
      %v802 = vsel %vm291, %v795, %v797
      %v803 = vsel %vm291, %v797, %v791
      %804 = vrot.lane.b32.xlu0 %v694, 92
      %v805 = vpop.permute.xlu0 %804
      %806 = vrot.lane.b32.xlu0 %v695, 92
      %v807 = vpop.permute.xlu0 %806
      %808 = vrot.lane.b32.xlu0 %v696, 92
      %v809 = vpop.permute.xlu0 %808
      %810 = vrot.lane.b32.xlu0 0.0, 92
      %v811 = vpop.permute.xlu0 %810
      %812 = vrot.lane.b32.xlu0 %v698, 92
      %v813 = vpop.permute.xlu0 %812
      %814 = vrot.lane.b32.xlu0 %v699, 92
      %v815 = vpop.permute.xlu0 %814
      %816 = vrot.lane.b32.xlu0 %v700, 92
      %v817 = vpop.permute.xlu0 %816
      %v818 = vsel %vm303, %v805, %v807
      %v819 = vsel %vm303, %v807, %v809
      %v820 = vsel %vm303, %v809, %v811
      %v821 = vsel %vm303, %v813, %v815
      %v822 = vsel %vm303, %v815, %v817
      %v823 = vsel %vm303, %v817, %v811
      %824 = vrot.lane.b32.xlu0 %v694, 91
      %v825 = vpop.permute.xlu0 %824
      %826 = vrot.lane.b32.xlu0 %v695, 91
      %v827 = vpop.permute.xlu0 %826
      %828 = vrot.lane.b32.xlu0 %v696, 91
      %v829 = vpop.permute.xlu0 %828
      %830 = vrot.lane.b32.xlu0 0.0, 91
      %v831 = vpop.permute.xlu0 %830
      %832 = vrot.lane.b32.xlu0 %v698, 91
      %v833 = vpop.permute.xlu0 %832
      %834 = vrot.lane.b32.xlu0 %v699, 91
      %v835 = vpop.permute.xlu0 %834
      %836 = vrot.lane.b32.xlu0 %v700, 91
      %v837 = vpop.permute.xlu0 %836
      %v838 = vsel %vm315, %v825, %v827
      %v839 = vsel %vm315, %v827, %v829
      %v840 = vsel %vm315, %v829, %v831
      %v841 = vsel %vm315, %v833, %v835
      %v842 = vsel %vm315, %v835, %v837
      %v843 = vsel %vm315, %v837, %v831
      %844 = vrot.lane.b32.xlu0 %v694, 90
      %v845 = vpop.permute.xlu0 %844
      %846 = vrot.lane.b32.xlu0 %v695, 90
      %v847 = vpop.permute.xlu0 %846
      %848 = vrot.lane.b32.xlu0 %v696, 90
      %v849 = vpop.permute.xlu0 %848
      %850 = vrot.lane.b32.xlu0 0.0, 90
      %v851 = vpop.permute.xlu0 %850
      %852 = vrot.lane.b32.xlu0 %v698, 90
      %v853 = vpop.permute.xlu0 %852
      %854 = vrot.lane.b32.xlu0 %v699, 90
      %v855 = vpop.permute.xlu0 %854
      %856 = vrot.lane.b32.xlu0 %v700, 90
      %v857 = vpop.permute.xlu0 %856
      %v858 = vsel %vm327, %v845, %v847
      %v859 = vsel %vm327, %v847, %v849
      %v860 = vsel %vm327, %v849, %v851
      %v861 = vsel %vm327, %v853, %v855
      %v862 = vsel %vm327, %v855, %v857
      %v863 = vsel %vm327, %v857, %v851
      %v864 = vld [vmem:[%s3] sm:$0xff]
      %v865 = vld [vmem:[%s3 + $0x8] sm:$0xff]
      %v866 = vld [vmem:[%s3 + $0x10] sm:$0x1]
      %v867 = vld [vmem:[%s3 + $0x18] sm:$0x1]
      %868 = vrot.lane.b32.xlu0 0.0, 19
      %v869 = vpop.permute.xlu0 %868
      %870 = vrot.lane.b32.xlu0 %v694, 19
      %v871 = vpop.permute.xlu0 %870
      %872 = vrot.lane.b32.xlu0 %v695, 19
      %v873 = vpop.permute.xlu0 %872
      %874 = vrot.lane.b32.xlu0 %v696, 19
      %v875 = vpop.permute.xlu0 %874
      %876 = vrot.lane.b32.xlu0 %v698, 19
      %v877 = vpop.permute.xlu0 %876
      %878 = vrot.lane.b32.xlu0 %v699, 19
      %v879 = vpop.permute.xlu0 %878
      %880 = vrot.lane.b32.xlu0 %v700, 19
      %v881 = vpop.permute.xlu0 %880
      %882 = vrot.lane.b32.xlu0 %v722, 19
      %v883 = vpop.permute.xlu0 %882
      %884 = vrot.lane.b32.xlu0 %v723, 19
      %v885 = vpop.permute.xlu0 %884
      %886 = vrot.lane.b32.xlu0 %v724, 19
      %v887 = vpop.permute.xlu0 %886
      %888 = vrot.lane.b32.xlu0 %v715, 19
      %v889 = vpop.permute.xlu0 %888
      %890 = vrot.lane.b32.xlu0 %v725, 19
      %v891 = vpop.permute.xlu0 %890
      %892 = vrot.lane.b32.xlu0 %v726, 19
      %v893 = vpop.permute.xlu0 %892
      %894 = vrot.lane.b32.xlu0 %v727, 19
      %v895 = vpop.permute.xlu0 %894
      %896 = vrot.lane.b32.xlu0 %v721, 19
      %v897 = vpop.permute.xlu0 %896
      %898 = vrot.lane.b32.xlu0 %v742, 19
      %v899 = vpop.permute.xlu0 %898
      %900 = vrot.lane.b32.xlu0 %v743, 19
      %v901 = vpop.permute.xlu0 %900
      %902 = vrot.lane.b32.xlu0 %v744, 19
      %v903 = vpop.permute.xlu0 %902
      %904 = vrot.lane.b32.xlu0 %v735, 19
      %v905 = vpop.permute.xlu0 %904
      %906 = vrot.lane.b32.xlu0 %v745, 19
      %v907 = vpop.permute.xlu0 %906
      %908 = vrot.lane.b32.xlu0 %v746, 19
      %v909 = vpop.permute.xlu0 %908
      %910 = vrot.lane.b32.xlu0 %v747, 19
      %v911 = vpop.permute.xlu0 %910
      %912 = vrot.lane.b32.xlu0 %v741, 19
      %v913 = vpop.permute.xlu0 %912
      %914 = vrot.lane.b32.xlu0 %v762, 19
      %v915 = vpop.permute.xlu0 %914
      %916 = vrot.lane.b32.xlu0 %v763, 19
      %v917 = vpop.permute.xlu0 %916
      %918 = vrot.lane.b32.xlu0 %v764, 19
      %v919 = vpop.permute.xlu0 %918
      %920 = vrot.lane.b32.xlu0 %v755, 19
      %v921 = vpop.permute.xlu0 %920
      %922 = vrot.lane.b32.xlu0 %v765, 19
      %v923 = vpop.permute.xlu0 %922
      %924 = vrot.lane.b32.xlu0 %v766, 19
      %v925 = vpop.permute.xlu0 %924
      %926 = vrot.lane.b32.xlu0 %v767, 19
      %v927 = vpop.permute.xlu0 %926
      %928 = vrot.lane.b32.xlu0 %v761, 19
      %v929 = vpop.permute.xlu0 %928
      %930 = vrot.lane.b32.xlu0 %v769, 19
      %v931 = vpop.permute.xlu0 %930
      %932 = vrot.lane.b32.xlu0 %v780, 19
      %v933 = vpop.permute.xlu0 %932
      %934 = vrot.lane.b32.xlu0 %v781, 19
      %v935 = vpop.permute.xlu0 %934
      %936 = vrot.lane.b32.xlu0 %v773, 19
      %v937 = vpop.permute.xlu0 %936
      %938 = vrot.lane.b32.xlu0 %v775, 19
      %v939 = vpop.permute.xlu0 %938
      %940 = vrot.lane.b32.xlu0 %v782, 19
      %v941 = vpop.permute.xlu0 %940
      %942 = vrot.lane.b32.xlu0 %v783, 19
      %v943 = vpop.permute.xlu0 %942
      %944 = vrot.lane.b32.xlu0 %v779, 19
      %v945 = vpop.permute.xlu0 %944
      %946 = vrot.lane.b32.xlu0 %v785, 19
      %v947 = vpop.permute.xlu0 %946
      %948 = vrot.lane.b32.xlu0 %v798, 19
      %v949 = vpop.permute.xlu0 %948
      %950 = vrot.lane.b32.xlu0 %v799, 19
      %v951 = vpop.permute.xlu0 %950
      %952 = vrot.lane.b32.xlu0 %v800, 19
      %v953 = vpop.permute.xlu0 %952
      %954 = vrot.lane.b32.xlu0 %v793, 19
      %v955 = vpop.permute.xlu0 %954
      %956 = vrot.lane.b32.xlu0 %v801, 19
      %v957 = vpop.permute.xlu0 %956
      %958 = vrot.lane.b32.xlu0 %v802, 19
      %v959 = vpop.permute.xlu0 %958
      %960 = vrot.lane.b32.xlu0 %v803, 19
      %v961 = vpop.permute.xlu0 %960
      %962 = vrot.lane.b32.xlu0 %v805, 19
      %v963 = vpop.permute.xlu0 %962
      %964 = vrot.lane.b32.xlu0 %v818, 19
      %v965 = vpop.permute.xlu0 %964
      %966 = vrot.lane.b32.xlu0 %v819, 19
      %v967 = vpop.permute.xlu0 %966
      %968 = vrot.lane.b32.xlu0 %v820, 19
      %v969 = vpop.permute.xlu0 %968
      %970 = vrot.lane.b32.xlu0 %v813, 19
      %v971 = vpop.permute.xlu0 %970
      %972 = vrot.lane.b32.xlu0 %v821, 19
      %v973 = vpop.permute.xlu0 %972
      %974 = vrot.lane.b32.xlu0 %v822, 19
      %v975 = vpop.permute.xlu0 %974
      %976 = vrot.lane.b32.xlu0 %v823, 19
      %v977 = vpop.permute.xlu0 %976
      %978 = vrot.lane.b32.xlu0 %v825, 19
      %v979 = vpop.permute.xlu0 %978
      %980 = vrot.lane.b32.xlu0 %v838, 19
      %v981 = vpop.permute.xlu0 %980
      %982 = vrot.lane.b32.xlu0 %v839, 19
      %v983 = vpop.permute.xlu0 %982
      %984 = vrot.lane.b32.xlu0 %v840, 19
      %v985 = vpop.permute.xlu0 %984
      %986 = vrot.lane.b32.xlu0 %v833, 19
      %v987 = vpop.permute.xlu0 %986
      %988 = vrot.lane.b32.xlu0 %v841, 19
      %v989 = vpop.permute.xlu0 %988
      %990 = vrot.lane.b32.xlu0 %v842, 19
      %v991 = vpop.permute.xlu0 %990
      %992 = vrot.lane.b32.xlu0 %v843, 19
      %v993 = vpop.permute.xlu0 %992
      %994 = vrot.lane.b32.xlu0 %v845, 19
      %v995 = vpop.permute.xlu0 %994
      %996 = vrot.lane.b32.xlu0 %v858, 19
      %v997 = vpop.permute.xlu0 %996
      %998 = vrot.lane.b32.xlu0 %v859, 19
      %v999 = vpop.permute.xlu0 %998
      %1000 = vrot.lane.b32.xlu0 %v860, 19
      %v1001 = vpop.permute.xlu0 %1000
      %1002 = vrot.lane.b32.xlu0 %v853, 19
      %v1003 = vpop.permute.xlu0 %1002
      %1004 = vrot.lane.b32.xlu0 %v861, 19
      %v1005 = vpop.permute.xlu0 %1004
      %1006 = vrot.lane.b32.xlu0 %v862, 19
      %v1007 = vpop.permute.xlu0 %1006
      %1008 = vrot.lane.b32.xlu0 %v863, 19
      %v1009 = vpop.permute.xlu0 %1008
      %v1010 = vsel %vm405, %v869, %v871
      %v1011 = vsel %vm405, %v871, %v873
      %v1012 = vsel %vm405, %v873, %v875
      %v1013 = vsel %vm405, %v869, %v877
      %v1014 = vsel %vm405, %v877, %v879
      %v1015 = vsel %vm405, %v879, %v881
      %v1016 = vsel %vm405, %v883, %v885
      %v1017 = vsel %vm405, %v885, %v887
      %v1018 = vsel %vm405, %v887, %v889
      %v1019 = vsel %vm405, %v891, %v893
      %v1020 = vsel %vm405, %v893, %v895
      %v1021 = vsel %vm405, %v895, %v897
      %v1022 = vsel %vm405, %v899, %v901
      %v1023 = vsel %vm405, %v901, %v903
      %v1024 = vsel %vm405, %v903, %v905
      %v1025 = vsel %vm405, %v907, %v909
      %v1026 = vsel %vm405, %v909, %v911
      %v1027 = vsel %vm405, %v911, %v913
      %v1028 = vsel %vm405, %v915, %v917
      %v1029 = vsel %vm405, %v917, %v919
      %v1030 = vsel %vm405, %v919, %v921
      %v1031 = vsel %vm405, %v923, %v925
      %v1032 = vsel %vm405, %v925, %v927
      %v1033 = vsel %vm405, %v927, %v929
      %v1034 = vsel %vm405, %v931, %v933
      %v1035 = vsel %vm405, %v933, %v935
      %v1036 = vsel %vm405, %v935, %v937
      %v1037 = vsel %vm405, %v939, %v941
      %v1038 = vsel %vm405, %v941, %v943
      %v1039 = vsel %vm405, %v943, %v945
      %v1040 = vsel %vm405, %v947, %v949
      %v1041 = vsel %vm405, %v949, %v951
      %v1042 = vsel %vm405, %v951, %v953
      %v1043 = vsel %vm405, %v955, %v957
      %v1044 = vsel %vm405, %v957, %v959
      %v1045 = vsel %vm405, %v959, %v961
      %v1046 = vsel %vm405, %v963, %v965
      %v1047 = vsel %vm405, %v965, %v967
      %v1048 = vsel %vm405, %v967, %v969
      %v1049 = vsel %vm405, %v971, %v973
      %v1050 = vsel %vm405, %v973, %v975
      %v1051 = vsel %vm405, %v975, %v977
      %v1052 = vsel %vm405, %v979, %v981
      %v1053 = vsel %vm405, %v981, %v983
      %v1054 = vsel %vm405, %v983, %v985
      %v1055 = vsel %vm405, %v987, %v989
      %v1056 = vsel %vm405, %v989, %v991
      %v1057 = vsel %vm405, %v991, %v993
      %v1058 = vsel %vm405, %v995, %v997
      %v1059 = vsel %vm405, %v997, %v999
      %v1060 = vsel %vm405, %v999, %v1001
      %v1061 = vsel %vm405, %v1003, %v1005
      %v1062 = vsel %vm405, %v1005, %v1007
      %v1063 = vsel %vm405, %v1007, %v1009
      %vm1118 = vcmask 130048
      %v1120 = vsel %vm1118, %v865, 0
      %v1123 = vsel %vm1118, %v867, 0
      %1125 = vmatprep.subr.mxu0 %v1011
      %1126 = vmatpush1.msra.mxu0 %v1010
      %1127 = vmatprep.subr.mxu0 %v1014
      %1128 = vmatpush1.msra.mxu0 %v1013
      %1129 = vmatprep.subr.mxu0 %v1017
      %1130 = vmatpush1.msra.mxu0 %v1016
      %1131 = vmatprep.subr.mxu0 %v1020
      %1132 = vmatpush1.msra.mxu0 %v1019
      %1133 = vmatprep.subr.mxu0 %v1023
      %1134 = vmatpush1.msra.mxu0 %v1022
      %1135 = vmatprep.subr.mxu0 %v1026
      %1136 = vmatpush1.msra.mxu0 %v1025
      %1137 = vmatprep.subr.mxu0 %v1029
      %1138 = vmatpush1.msra.mxu0 %v1028
      %1139 = vmatprep.subr.mxu0 %v1032
      %1140 = vmatpush1.msra.mxu0 %v1031
      %1141 = vmatprep.subr.mxu0 %v1035
      %1142 = vmatpush1.msra.mxu0 %v1034
      %1143 = vmatprep.subr.mxu0 %v1038
      %1144 = vmatpush1.msra.mxu0 %v1037
      %1145 = vmatprep.subr.mxu0 %v1041
      %1146 = vmatpush1.msra.mxu0 %v1040
      %1147 = vmatprep.subr.mxu0 %v1044
      %1148 = vmatpush1.msra.mxu0 %v1043
      %1149 = vmatprep.subr.mxu0 %v1047
      %1150 = vmatpush1.msra.mxu0 %v1046
      %1151 = vmatprep.subr.mxu0 %v1050
      %1152 = vmatpush1.msra.mxu0 %v1049
      %1153 = vmatprep.subr.mxu0 %v1053
      %1154 = vmatpush1.msra.mxu0 %v1052
      %1155 = vmatprep.subr.mxu0 %v1056
      %1156 = vmatpush1.msra.mxu0 %v1055
      %1157 = vmatprep.subr.mxu0 %v1059
      %1158 = vmatpush1.msra.mxu0 %v1058
      %1159 = vmatprep.subr.mxu0 %v1062
      %1160 = vmatpush1.msra.mxu0 %v1061
      %1161 = vmatprep.subr.mxu0 0.0
      %1162 = vmatpush1.msra.mxu0 0.0
      %1163 = vmatprep.subr.mxu0 0.0
      %1164 = vmatpush1.msra.mxu0 0.0
      %1165 = vmatprep.subr.mxu0 0.0
      %1166 = vmatpush1.msra.mxu0 0.0
      %1167 = vmatprep.subr.mxu0 0.0
      %1168 = vmatpush1.msra.mxu0 0.0
      %1169 = vmatprep.subr.mxu0 0.0
      %1170 = vmatpush1.msra.mxu0 0.0
      %1171 = vmatprep.subr.mxu0 0.0
      %1172 = vmatpush1.msra.mxu0 0.0
      %1173 = vmatprep.subr.mxu0 0.0
      %1174 = vmatpush1.msra.mxu0 0.0
      %1175 = vmatprep.subr.mxu0 0.0
      %1176 = vmatpush1.msra.mxu0 0.0
      %1177 = vmatprep.subr.mxu0 0.0
      %1178 = vmatpush1.msra.mxu0 0.0
      %1179 = vmatprep.subr.mxu0 0.0
      %1180 = vmatpush1.msra.mxu0 0.0
      %1181 = vmatprep.subr.mxu0 0.0
      %1182 = vmatpush1.msra.mxu0 0.0
      %1183 = vmatprep.subr.mxu0 0.0
      %1184 = vmatpush1.msra.mxu0 0.0
      %1185 = vmatprep.subr.mxu0 0.0
      %1186 = vmatpush1.msra.mxu0 0.0
      %1187 = vmatprep.subr.mxu0 0.0
      %1188 = vmatpush1.msra.mxu0 0.0
      %1189 = vmatprep.mubr.f32.mxu0 %v1120
      %1190 = vmatmul.mubr.f32.gmra.mrb[0].mxu0 %v864
      %v1191 = vpop.f32.mrb[0].mxu0
      %v1192 = vadd.f32 0.0, %v1191
      %v1193 = vpop.f32.mrb[0].mxu0
      %v1194 = vadd.f32 0.0, %v1193
      %1195 = vmatprep.mubr.f32.mxu0 %v1123
      %1196 = vmatmul.mubr.f32.gmra.mrb[0].mxu0 %v866
      %v1197 = vpop.f32.mrb[0].mxu0
      %v1198 = vadd.f32 0.0, %v1197
      %v1199 = vpop.f32.mrb[0].mxu0
      %v1200 = vadd.f32 0.0, %v1199
      %1201 = vdwg.mxu0
      %1202 = vmatprep.subr.mxu0 0.0
      %1203 = vmatpush1.msra.mxu0 %v1012
      %1204 = vmatprep.subr.mxu0 0.0
      %1205 = vmatpush1.msra.mxu0 %v1015
      %1206 = vmatprep.subr.mxu0 0.0
      %1207 = vmatpush1.msra.mxu0 %v1018
      %1208 = vmatprep.subr.mxu0 0.0
      %1209 = vmatpush1.msra.mxu0 %v1021
      %1210 = vmatprep.subr.mxu0 0.0
      %1211 = vmatpush1.msra.mxu0 %v1024
      %1212 = vmatprep.subr.mxu0 0.0
      %1213 = vmatpush1.msra.mxu0 %v1027
      %1214 = vmatprep.subr.mxu0 0.0
      %1215 = vmatpush1.msra.mxu0 %v1030
      %1216 = vmatprep.subr.mxu0 0.0
      %1217 = vmatpush1.msra.mxu0 %v1033
      %1218 = vmatprep.subr.mxu0 0.0
      %1219 = vmatpush1.msra.mxu0 %v1036
      %1220 = vmatprep.subr.mxu0 0.0
      %1221 = vmatpush1.msra.mxu0 %v1039
      %1222 = vmatprep.subr.mxu0 0.0
      %1223 = vmatpush1.msra.mxu0 %v1042
      %1224 = vmatprep.subr.mxu0 0.0
      %1225 = vmatpush1.msra.mxu0 %v1045
      %1226 = vmatprep.subr.mxu0 0.0
      %1227 = vmatpush1.msra.mxu0 %v1048
      %1228 = vmatprep.subr.mxu0 0.0
      %1229 = vmatpush1.msra.mxu0 %v1051
      %1230 = vmatprep.subr.mxu0 0.0
      %1231 = vmatpush1.msra.mxu0 %v1054
      %1232 = vmatprep.subr.mxu0 0.0
      %1233 = vmatpush1.msra.mxu0 %v1057
      %1234 = vmatprep.subr.mxu0 0.0
      %1235 = vmatpush1.msra.mxu0 %v1060
      %1236 = vmatprep.subr.mxu0 0.0
      %1237 = vmatpush1.msra.mxu0 %v1063
      %1238 = vmatprep.subr.mxu0 0.0
      %1239 = vmatpush1.msra.mxu0 0.0
      %1240 = vmatprep.subr.mxu0 0.0
      %1241 = vmatpush1.msra.mxu0 0.0
      %1242 = vmatprep.subr.mxu0 0.0
      %1243 = vmatpush1.msra.mxu0 0.0
      %1244 = vmatprep.subr.mxu0 0.0
      %1245 = vmatpush1.msra.mxu0 0.0
      %1246 = vmatprep.subr.mxu0 0.0
      %1247 = vmatpush1.msra.mxu0 0.0
      %1248 = vmatprep.subr.mxu0 0.0
      %1249 = vmatpush1.msra.mxu0 0.0
      %1250 = vmatprep.subr.mxu0 0.0
      %1251 = vmatpush1.msra.mxu0 0.0
      %1252 = vmatprep.subr.mxu0 0.0
      %1253 = vmatpush1.msra.mxu0 0.0
      %1254 = vmatprep.subr.mxu0 0.0
      %1255 = vmatpush1.msra.mxu0 0.0
      %1256 = vmatprep.subr.mxu0 0.0
      %1257 = vmatpush1.msra.mxu0 0.0
      %1258 = vmatprep.subr.mxu0 0.0
      %1259 = vmatpush1.msra.mxu0 0.0
      %1260 = vmatprep.subr.mxu0 0.0
      %1261 = vmatpush1.msra.mxu0 0.0
      %1262 = vmatprep.subr.mxu0 0.0
      %1263 = vmatpush1.msra.mxu0 0.0
      %1264 = vmatprep.subr.mxu0 0.0
      %1265 = vmatpush1.msra.mxu0 0.0
      %1266 = vmatprep.mubr.f32.mxu0 %v1120
      %1267 = vmatmul.mubr.f32.gmra.mrb[0].mxu0 %v864
      %v1268 = vpop.f32.mrb[0].mxu0
      %v1269 = vadd.f32 0.0, %v1268
      %v1270 = vpop.f32.mrb[0].mxu0
      %1271 = vmatprep.mubr.f32.mxu0 %v1123
      %1272 = vmatmul.mubr.f32.gmra.mrb[0].mxu0 %v866
      %v1273 = vpop.f32.mrb[0].mxu0
      %v1274 = vadd.f32 0.0, %v1273
      %v1275 = vpop.f32.mrb[0].mxu0
      %1276 = vdwg.mxu0
      %v1277 = vmax.f32 %v1198, 0.0
      %v1278 = vmax.f32 %v1200, 0.0
      %v1279 = vmax.f32 %v1274, 0.0
      %v1280 = vmin.f32 %v1277, 1.0
      %v1281 = vmin.f32 %v1278, 1.0
      %v1282 = vmin.f32 %v1279, 1.0
      %v1283 = vadd.f32 %v1198, 1e-06
      %v1284 = vadd.f32 %v1200, 1e-06
      %v1285 = vadd.f32 %v1274, 1e-06
      %v1286 = vrcp.pop %v1283
      %v1287 = vrcp.pop %v1284
      %v1288 = vrcp.pop %v1285
      %v1289 = vmul.f32 %v1286, 9.0
      %v1290 = vmul.f32 %v1287, 9.0
      %v1291 = vmul.f32 %v1288, 9.0
      %v1292 = vmul.f32 %v1289, %v1280
      %v1293 = vmul.f32 %v1290, %v1281
      %v1294 = vmul.f32 %v1291, %v1282
      %v1295 = vld [vmem:[%s4] sm:$0xff]
      %v1296 = vlaneseq
      %v1297 = vshrl.u32 %v1296, 7
      %v1298 = vsub.s32 0, %v1297
      %v1299 = vrot.slane %v1292, %v1298
      %v1300 = vlaneseq
      %v1301 = vshrl.u32 %v1300, 7
      %v1302 = vsub.s32 0, %v1301
      %v1303 = vrot.slane %v1293, %v1302
      %v1304 = vlaneseq
      %v1305 = vshrl.u32 %v1304, 7
      %v1306 = vsub.s32 0, %v1305
      %v1307 = vrot.slane %v1294, %v1306
      %v1308 = vmul.f32 %v1192, %v1299
      %v1309 = vmul.f32 %v1194, %v1303
      %v1310 = vmul.f32 %v1269, %v1307
      %1312 = vset.pattern.permute.xlu0 0
      %1313 = vperm.xlu0 %1312, %v1295
      %v1314 = vpop.permute.xlu0 %1313
      %v1316 = vadd.f32 %v1308, %v1314
      %v1317 = vadd.f32 %v1309, %v1314
      %v1318 = vadd.f32 %v1310, %v1314
      %v1319 = vlaneseq
      %v1320 = vshrl.u32 %v1319, 7
      %v1321 = vsub.s32 0, %v1320
      %v1322 = vrot.slane %v1280, %v1321
      %v1323 = vlaneseq
      %v1324 = vshrl.u32 %v1323, 7
      %v1325 = vsub.s32 0, %v1324
      %v1326 = vrot.slane %v1281, %v1325
      %v1327 = vlaneseq
      %v1328 = vshrl.u32 %v1327, 7
      %v1329 = vsub.s32 0, %v1328
      %v1330 = vrot.slane %v1282, %v1329
      %v1331 = vmul.f32 %v1316, %v1322
      %v1332 = vmul.f32 %v1317, %v1326
      %v1333 = vmul.f32 %v1318, %v1330
      %1334 = vst [vmem:[%s224] sm:$0xff] %v1331
      %1335 = vst [vmem:[%s224 + $0x8] sm:$0xff] %v1332
      %1336 = vst [vmem:[%s224 + $0x10] sm:$0xff] %v1333
      %1337 = vst [vmem:[%s224 + $0x18] sm:$0x1] %v1280
      %1338 = vst [vmem:[%s224 + $0x20] sm:$0x1] %v1281
      %1339 = vst [vmem:[%s224 + $0x28] sm:$0x1] %v1282
      %p1340 = scmp.lt.s32.totalorder %s16, 1
      %s1341 = scalar_select %p1340, %s16, 1
      %s1342 = smul.addr %s1341, 6
      %s1343 = smul.addr %s1342, 8
      %s1344 = scalar_lea.vmem %s5, %s1343
      // Predicated region
      $region41: #{tpu_custom_call.1} parent=39 // pred_check
        %p1345 = pneg %p144
      $region42: #{tpu_custom_call.1} parent=39 // pred_check_branch
        %1347 = sbr.rel (%p1345) target = $region44
      $region43: #{tpu_custom_call.1} parent=39 // pred_region
        _
      $region44: #{tpu_custom_call.1} parent=39 // pred_fallthru
        _
    $region40: #{tpu_custom_call.1} parent=5 // pred_fallthru
      _
    %p1348 = scmp.le.s32.totalorder 2, %s11
    // Predicated region
    $region45: #{tpu_custom_call.1} parent=5 // pred_check
      %p1349 = pneg %p1348
    $region46: #{tpu_custom_call.1} parent=5 // pred_check_branch
      %1351 = sbr.rel (%p1349) target = $region48
    $region47: #{tpu_custom_call.1} parent=5 // pred_region
      %s1352 = ssub.s32 %s11, 2
      // Predicated region
      $region49: #{tpu_custom_call.1} parent=47 // pred_check
        %p1353 = pneg %p150
      $region50: #{tpu_custom_call.1} parent=47 // pred_check_branch
        %1355 = sbr.rel (%p1353) target = $region52
      $region51: #{tpu_custom_call.1} parent=47 // pred_region
        %p1356 = scmp.lt.s32.totalorder %s17, 1
        %s1357 = scalar_select %p1356, %s17, 1
        %s1358 = smul.addr %s1357, 6
        %s1359 = smul.addr %s1358, 8
        %s1360 = scalar_lea.vmem %s5, %s1359
      $region52: #{tpu_custom_call.1} parent=47 // pred_fallthru
        _
    $region48: #{tpu_custom_call.1} parent=5 // pred_fallthru
      _
  $region6: #{tpu_custom_call.1} parent=0 // loop_footer
    %s15 = sadd.s32 1, %s11
  $region7: #{tpu_custom_call.1} parent=0 // loop_footer_branch
    %10 = sbr.rel target = $region3
  $region8: #{tpu_custom_call.1} parent=0 // loop_exit
    _

</llo_original>
